<compile_context>
chip_gen: v7x
topology: tpu7x:2x2x1
jax: 0.10.0
libtpu: 0.0.40
codegen_flags: <defaults>
</compile_context>

<pallas_src>
import numpy as np
import jax
import jax.numpy as jnp
from jax.experimental import pallas as pl
from jax.experimental.pallas import tpu as pltpu

LANE = 128          # TPU lane width: every layer-boundary dim is padded to this
NEG_SLOPE = 0.2


def _round_up(x, m):
    return ((x + m - 1) // m) * m


# ---------------------------------------------------------------------------
# Fused Pallas kernel:  out = L5(L4(L3(L2(L1(x)))))  with  Ll(h) = leaky_relu(h @ Wl + bl)
# ---------------------------------------------------------------------------
def _make_fused_kernel(n_layers):
    def kernel(x_ref, *rest):
        o_ref = rest[-1]
        wb = rest[:-1]
        h = x_ref[...]                                   # bf16 (tm, D0_pad)
        for l in range(n_layers):
            w_ref, b_ref = wb[2 * l], wb[2 * l + 1]
            acc = jnp.dot(h, w_ref[...],
                          preferred_element_type=jnp.float32) + b_ref[...]
            act = jnp.where(acc >= 0.0, acc, NEG_SLOPE * acc)
            h = act if l == n_layers - 1 else act.astype(jnp.bfloat16)
        o_ref[...] = h                                   # f32, lane-dense (128-padded)
    return kernel


def fused_encoder_call(x_flat, layers, latent_dim):
    """x_flat: (M, D0).  layers: [(W (K,N) bf16, b (1,N) f32), ...] with chained padded
    dims (layer l's N == layer l+1's K).  Returns leaky-relu'd chain, (M, latent_dim) f32."""
    M, D0 = x_flat.shape
    d0p = layers[0][0].shape[0]
    n_out = layers[-1][0].shape[1]
    assert D0 <= d0p

    # Row (batch) tiling: pad to a sublane multiple; split into >=2 tiles when there is
    # enough work so both v7x TensorCores get rows (no effect on v5e/v6e: one TC/chip).
    Mp = _round_up(M, 8)
    tm = Mp if Mp < 16 else min(128, _round_up(Mp // 2, 8))
    Mp = _round_up(Mp, tm)
    grid = (Mp // tm,)

    # Everything (all weights + per-layer activation tiles) must fit comfortably in VMEM.
    w_bytes = sum(int(w.size) * 2 + int(b.size) * 4 for w, b in layers)
    act_bytes = tm * max([d0p] + [int(w.shape[1]) for w, _ in layers]) * 4
    assert w_bytes + 4 * act_bytes < 24 * 1024 * 1024, (
        "config too large for the fully-fused VMEM-resident path (see TODO at top)")

    xp = x_flat
    if (Mp, d0p) != (M, D0):
        xp = jnp.pad(x_flat, ((0, Mp - M), (0, d0p - D0)))
    xp = xp.astype(jnp.bfloat16)

    flops = sum(2 * Mp * int(w.shape[0]) * int(w.shape[1]) for w, _ in layers)
    cost = pl.CostEstimate(
        flops=flops,
        transcendentals=0,
        bytes_accessed=Mp * d0p * 2 + w_bytes + Mp * n_out * 4,
    )

    in_specs = [pl.BlockSpec((tm, d0p), lambda i: (i, 0))]
    args = [xp]
    for w, b in layers:
        in_specs.append(pl.BlockSpec(tuple(w.shape), lambda i: (0, 0)))
        in_specs.append(pl.BlockSpec(tuple(b.shape), lambda i: (0, 0)))
        args += [w, b]

    out = pl.pallas_call(
        _make_fused_kernel(len(layers)),
        out_shape=jax.ShapeDtypeStruct((Mp, n_out), jnp.float32),
        grid_spec=pltpu.PrefetchScalarGridSpec(
            num_scalar_prefetch=0,
            grid=grid,
            in_specs=in_specs,
            out_specs=pl.BlockSpec((tm, n_out), lambda i: (i, 0)),
        ),
        compiler_params=pltpu.CompilerParams(
            dimension_semantics=("parallel",),
            vmem_limit_bytes=32 * 1024 * 1024,
        ),
        cost_estimate=cost,
    )(*args)
    return out[:M, :latent_dim]


# ---------------------------------------------------------------------------
# Pack time: lower each Conv2d(k=4, s=2, p=1) to its exact dense transition matrix
# (NHWC-flatten in, NHWC-flatten out), apply spectral_norm, pad to lane multiples.
# ---------------------------------------------------------------------------
def _conv_to_matrix(w, b, H, W):
    """Exact matrix so that  out_flat = in_flat @ Wmat + b_flat  for one sample,
    where in/out are NHWC-flattened ((h, w, c) order).  w: (Cout, Cin, 4, 4)."""
    cout, cin, KH, KW = w.shape
    Ho, Wo = H // 2, W // 2
    Wmat = np.zeros((H, W, cin, Ho, Wo, cout), np.float32)
    for kh in range(KH):
        for kw in range(KW):
            tap = w[:, :, kh, kw].T                       # (cin, cout)
            for oh in range(Ho):
                ih = 2 * oh + kh - 1                       # stride 2, padding 1
                if ih < 0 or ih >= H:
                    continue
                for ow in range(Wo):
                    iw = 2 * ow + kw - 1
                    if iw < 0 or iw >= W:
                        continue
                    Wmat[ih, iw, :, oh, ow, :] = tap
    return Wmat.reshape(H * W * cin, Ho * Wo * cout), np.tile(b, Ho * Wo)


def init_encoder_params(key, image_size, image_channel, std_channel, latent_dim):
    """Deterministic synthetic parameters in PyTorch layout."""
    channels = [std_channel, std_channel * 2, std_channel * 4]
    s_fc = image_size // 16
    fc_in = s_fc * s_fc * channels[-1]
    specs = [("layer1", image_channel, channels[0]),
             ("layer2", channels[0], channels[1]),
             ("layer3", channels[1], channels[1]),
             ("feature", channels[1], channels[2])]
    params = {}
    keys = jax.random.split(key, len(specs) + 1)
    for k, (name, cin, cout) in zip(keys[:-1], specs):
        kw_, kb_ = jax.random.split(k)
        params[name] = (
            0.05 * jax.random.normal(kw_, (cout, cin, 4, 4), dtype=jnp.float32),
            0.01 * jax.random.normal(kb_, (cout,), dtype=jnp.float32),
        )
    kw_, kb_ = jax.random.split(keys[-1])
    params["fc"] = (
        0.05 * jax.random.normal(kw_, (latent_dim, fc_in), dtype=jnp.float32),  # nn.Linear layout
        0.01 * jax.random.normal(kb_, (latent_dim,), dtype=jnp.float32),
    )
    return params


def pack_params(raw, image_size, image_channel, std_channel, latent_dim, norm="sp"):
    channels = [std_channel, std_channel * 2, std_channel * 4]
    conv_order = [("layer1", image_channel, channels[0]),
                  ("layer2", channels[0], channels[1]),
                  ("layer3", channels[1], channels[1]),
                  ("feature", channels[1], channels[2])]
    layers = []
    H = image_size
    in_pad = _round_up(image_size * image_size * image_channel, LANE)
    for name, cin, cout in conv_order:
        w, b = raw[name]
        w = np.asarray(w, np.float32)
        b = np.asarray(b, np.float32)
        if norm == "sp":
            # spectral_norm: W / sigma_max(W.reshape(Cout, -1)).  Exact sigma via SVD;
            # PyTorch uses a running power-iteration estimate of the same quantity.
            sigma = float(np.linalg.svd(w.reshape(cout, -1), compute_uv=False)[0])
            w = w / sigma
        Wmat, b_flat = _conv_to_matrix(w, b, H, H)
        out_dim = Wmat.shape[1]
        out_pad = _round_up(out_dim, LANE)
        Wmat = np.pad(Wmat, ((0, in_pad - Wmat.shape[0]), (0, out_pad - out_dim)))
        b_flat = np.pad(b_flat, (0, out_pad - out_dim)).reshape(1, out_pad)
        layers.append((jnp.asarray(Wmat, jnp.bfloat16), jnp.asarray(b_flat, jnp.float32)))
        H //= 2
        in_pad = out_pad

    # FC: nn.Linear weight is (latent, fc_in) with fc_in in NCHW-flatten (c,h,w) order;
    # re-order rows to NHWC (h,w,c) so it directly consumes the last conv's flat output.
    w_fc, b_fc = raw["fc"]
    w_fc = np.asarray(w_fc, np.float32)
    b_fc = np.asarray(b_fc, np.float32)
    if norm == "sp":
        sigma = float(np.linalg.svd(w_fc, compute_uv=False)[0])
        w_fc = w_fc / sigma
    S, c_last = H, channels[-1]
    wt = w_fc.T.reshape(c_last, S, S, latent_dim).transpose(1, 2, 0, 3)
    wt = wt.reshape(S * S * c_last, latent_dim)
    lat_pad = _round_up(latent_dim, LANE)
    wt = np.pad(wt, ((0, in_pad - wt.shape[0]), (0, lat_pad - latent_dim)))
    bf = np.pad(b_fc, (0, lat_pad - latent_dim)).reshape(1, lat_pad)
    layers.append((jnp.asarray(wt, jnp.bfloat16), jnp.asarray(bf, jnp.float32)))
    return {"layers": layers, "latent": latent_dim}


# ---------------------------------------------------------------------------
# Forward pass (matches Encoder_module.forward)
# ---------------------------------------------------------------------------
def encoder_forward(x_nchw, packed):
    n = x_nchw.shape[0]
    # NCHW -> NHWC-flatten once (matches the packed weight-row ordering); everything else
    # happens inside the single fused Pallas kernel.
    x = jnp.transpose(x_nchw, (0, 2, 3, 1)).reshape(n, -1)
    return fused_encoder_call(x, packed["layers"], packed["latent"])


if __name__ == "__main__":
    # Small, module-consistent config: image_size must be divisible by 16.
    batch = 2
    image_size = 16
    image_channel = 4
    std_channel = 8
    latent_dim = 32

    key = jax.random.PRNGKey(0)
    k_x, k_p = jax.random.split(key)
    x = jax.random.normal(k_x, (batch, image_channel, image_size, image_size),
                          dtype=jnp.float32)
    raw_params = init_encoder_params(k_p, image_size, image_channel, std_channel,
                                     latent_dim)
    packed = pack_params(raw_params, image_size, image_channel, std_channel,
                         latent_dim, norm="sp")

    fwd = jax.jit(lambda xx: encoder_forward(xx, packed))
    out = jax.block_until_ready(fwd(x))
    assert out.shape == (batch, latent_dim), out.shape
    assert bool(jnp.all(jnp.isfinite(out)))
    print("KERNEL_OK")
</pallas_src>

<mosaic_0001>
module attributes {stable_mosaic.version = 11 : i64} {
  func.func @kernel(%arg0: i32, %arg1: memref<8x1024xbf16, #tpu.memory_space<vmem>>, %arg2: memref<1024x512xbf16, #tpu.memory_space<vmem>>, %arg3: memref<1x512xf32, #tpu.memory_space<vmem>>, %arg4: memref<512x256xbf16, #tpu.memory_space<vmem>>, %arg5: memref<1x256xf32, #tpu.memory_space<vmem>>, %arg6: memref<256x128xbf16, #tpu.memory_space<vmem>>, %arg7: memref<1x128xf32, #tpu.memory_space<vmem>>, %arg8: memref<128x128xbf16, #tpu.memory_space<vmem>>, %arg9: memref<1x128xf32, #tpu.memory_space<vmem>>, %arg10: memref<128x128xbf16, #tpu.memory_space<vmem>>, %arg11: memref<1x128xf32, #tpu.memory_space<vmem>>, %arg12: memref<8x128xf32, #tpu.memory_space<vmem>>) attributes {dimension_semantics = [#tpu.dimension_semantics<parallel>], iteration_bounds = array<i64: 1>, scalar_prefetch = 0 : i64, scratch_operands = 0 : i64, tpu.core_type = #tpu.core_type<tc>, window_params = [{transform_indices = @transform_0, window_bounds = array<i64: 8, 1024>}, {pipeline_mode = #tpu.pipeline_mode<synchronous>, transform_indices = @transform_1, window_bounds = array<i64: 1024, 512>}, {pipeline_mode = #tpu.pipeline_mode<synchronous>, transform_indices = @transform_2, window_bounds = array<i64: 1, 512>}, {pipeline_mode = #tpu.pipeline_mode<synchronous>, transform_indices = @transform_3, window_bounds = array<i64: 512, 256>}, {pipeline_mode = #tpu.pipeline_mode<synchronous>, transform_indices = @transform_4, window_bounds = array<i64: 1, 256>}, {pipeline_mode = #tpu.pipeline_mode<synchronous>, transform_indices = @transform_5, window_bounds = array<i64: 256, 128>}, {pipeline_mode = #tpu.pipeline_mode<synchronous>, transform_indices = @transform_6, window_bounds = array<i64: 1, 128>}, {pipeline_mode = #tpu.pipeline_mode<synchronous>, transform_indices = @transform_7, window_bounds = array<i64: 128, 128>}, {pipeline_mode = #tpu.pipeline_mode<synchronous>, transform_indices = @transform_8, window_bounds = array<i64: 1, 128>}, {pipeline_mode = #tpu.pipeline_mode<synchronous>, transform_indices = @transform_9, window_bounds = array<i64: 128, 128>}, {pipeline_mode = #tpu.pipeline_mode<synchronous>, transform_indices = @transform_10, window_bounds = array<i64: 1, 128>}, {transform_indices = @transform_11, window_bounds = array<i64: 8, 128>}]} {
    %c0 = arith.constant 0 : index
    %c0_0 = arith.constant 0 : index
    %0 = vector.load %arg1[%c0, %c0_0] : memref<8x1024xbf16, #tpu.memory_space<vmem>>, vector<8x1024xbf16>
    %c0_1 = arith.constant 0 : index
    %c0_2 = arith.constant 0 : index
    %1 = vector.load %arg2[%c0_1, %c0_2] : memref<1024x512xbf16, #tpu.memory_space<vmem>>, vector<1024x512xbf16>
    %cst = arith.constant dense<0.000000e+00> : vector<8x512xf32>
    %2 = tpu.matmul %0, %1, %cst {dimension_numbers = #tpu.dot_dimension_numbers<[1], [0], [0], [1], [0, 0, 1, 1], [], []>} : vector<8x1024xbf16>, vector<1024x512xbf16>, vector<8x512xf32> -> vector<8x512xf32>
    %c0_3 = arith.constant 0 : index
    %c0_4 = arith.constant 0 : index
    %3 = vector.load %arg3[%c0_3, %c0_4] : memref<1x512xf32, #tpu.memory_space<vmem>>, vector<1x512xf32>
    %4 = vector.broadcast %3 : vector<1x512xf32> to vector<8x512xf32>
    %5 = arith.addf %2, %4 : vector<8x512xf32>
    %cst_5 = arith.constant 0.000000e+00 : f32
    %6 = vector.broadcast %cst_5 : f32 to vector<8x512xf32>
    %7 = arith.cmpf oge, %5, %6 : vector<8x512xf32>
    %cst_6 = arith.constant 2.000000e-01 : f32
    %8 = vector.broadcast %cst_6 : f32 to vector<8x512xf32>
    %9 = arith.mulf %8, %5 : vector<8x512xf32>
    %10 = arith.select %7, %5, %9 : vector<8x512xi1>, vector<8x512xf32>
    %11 = arith.truncf %10 : vector<8x512xf32> to vector<8x512xbf16>
    %c0_7 = arith.constant 0 : index
    %c0_8 = arith.constant 0 : index
    %12 = vector.load %arg4[%c0_7, %c0_8] : memref<512x256xbf16, #tpu.memory_space<vmem>>, vector<512x256xbf16>
    %cst_9 = arith.constant dense<0.000000e+00> : vector<8x256xf32>
    %13 = tpu.matmul %11, %12, %cst_9 {dimension_numbers = #tpu.dot_dimension_numbers<[1], [0], [0], [1], [0, 0, 1, 1], [], []>} : vector<8x512xbf16>, vector<512x256xbf16>, vector<8x256xf32> -> vector<8x256xf32>
    %c0_10 = arith.constant 0 : index
    %c0_11 = arith.constant 0 : index
    %14 = vector.load %arg5[%c0_10, %c0_11] : memref<1x256xf32, #tpu.memory_space<vmem>>, vector<1x256xf32>
    %15 = vector.broadcast %14 : vector<1x256xf32> to vector<8x256xf32>
    %16 = arith.addf %13, %15 : vector<8x256xf32>
    %cst_12 = arith.constant 0.000000e+00 : f32
    %17 = vector.broadcast %cst_12 : f32 to vector<8x256xf32>
    %18 = arith.cmpf oge, %16, %17 : vector<8x256xf32>
    %cst_13 = arith.constant 2.000000e-01 : f32
    %19 = vector.broadcast %cst_13 : f32 to vector<8x256xf32>
    %20 = arith.mulf %19, %16 : vector<8x256xf32>
    %21 = arith.select %18, %16, %20 : vector<8x256xi1>, vector<8x256xf32>
    %22 = arith.truncf %21 : vector<8x256xf32> to vector<8x256xbf16>
    %c0_14 = arith.constant 0 : index
    %c0_15 = arith.constant 0 : index
    %23 = vector.load %arg6[%c0_14, %c0_15] : memref<256x128xbf16, #tpu.memory_space<vmem>>, vector<256x128xbf16>
    %cst_16 = arith.constant dense<0.000000e+00> : vector<8x128xf32>
    %24 = tpu.matmul %22, %23, %cst_16 {dimension_numbers = #tpu.dot_dimension_numbers<[1], [0], [0], [1], [0, 0, 1, 1], [], []>} : vector<8x256xbf16>, vector<256x128xbf16>, vector<8x128xf32> -> vector<8x128xf32>
    %c0_17 = arith.constant 0 : index
    %c0_18 = arith.constant 0 : index
    %25 = vector.load %arg7[%c0_17, %c0_18] : memref<1x128xf32, #tpu.memory_space<vmem>>, vector<1x128xf32>
    %26 = vector.broadcast %25 : vector<1x128xf32> to vector<8x128xf32>
    %27 = arith.addf %24, %26 : vector<8x128xf32>
    %cst_19 = arith.constant 0.000000e+00 : f32
    %28 = vector.broadcast %cst_19 : f32 to vector<8x128xf32>
    %29 = arith.cmpf oge, %27, %28 : vector<8x128xf32>
    %cst_20 = arith.constant 2.000000e-01 : f32
    %30 = vector.broadcast %cst_20 : f32 to vector<8x128xf32>
    %31 = arith.mulf %30, %27 : vector<8x128xf32>
    %32 = arith.select %29, %27, %31 : vector<8x128xi1>, vector<8x128xf32>
    %33 = arith.truncf %32 : vector<8x128xf32> to vector<8x128xbf16>
    %c0_21 = arith.constant 0 : index
    %c0_22 = arith.constant 0 : index
    %34 = vector.load %arg8[%c0_21, %c0_22] : memref<128x128xbf16, #tpu.memory_space<vmem>>, vector<128x128xbf16>
    %cst_23 = arith.constant dense<0.000000e+00> : vector<8x128xf32>
    %35 = tpu.matmul %33, %34, %cst_23 {dimension_numbers = #tpu.dot_dimension_numbers<[1], [0], [0], [1], [0, 0, 1, 1], [], []>} : vector<8x128xbf16>, vector<128x128xbf16>, vector<8x128xf32> -> vector<8x128xf32>
    %c0_24 = arith.constant 0 : index
    %c0_25 = arith.constant 0 : index
    %36 = vector.load %arg9[%c0_24, %c0_25] : memref<1x128xf32, #tpu.memory_space<vmem>>, vector<1x128xf32>
    %37 = vector.broadcast %36 : vector<1x128xf32> to vector<8x128xf32>
    %38 = arith.addf %35, %37 : vector<8x128xf32>
    %cst_26 = arith.constant 0.000000e+00 : f32
    %39 = vector.broadcast %cst_26 : f32 to vector<8x128xf32>
    %40 = arith.cmpf oge, %38, %39 : vector<8x128xf32>
    %cst_27 = arith.constant 2.000000e-01 : f32
    %41 = vector.broadcast %cst_27 : f32 to vector<8x128xf32>
    %42 = arith.mulf %41, %38 : vector<8x128xf32>
    %43 = arith.select %40, %38, %42 : vector<8x128xi1>, vector<8x128xf32>
    %44 = arith.truncf %43 : vector<8x128xf32> to vector<8x128xbf16>
    %c0_28 = arith.constant 0 : index
    %c0_29 = arith.constant 0 : index
    %45 = vector.load %arg10[%c0_28, %c0_29] : memref<128x128xbf16, #tpu.memory_space<vmem>>, vector<128x128xbf16>
    %cst_30 = arith.constant dense<0.000000e+00> : vector<8x128xf32>
    %46 = tpu.matmul %44, %45, %cst_30 {dimension_numbers = #tpu.dot_dimension_numbers<[1], [0], [0], [1], [0, 0, 1, 1], [], []>} : vector<8x128xbf16>, vector<128x128xbf16>, vector<8x128xf32> -> vector<8x128xf32>
    %c0_31 = arith.constant 0 : index
    %c0_32 = arith.constant 0 : index
    %47 = vector.load %arg11[%c0_31, %c0_32] : memref<1x128xf32, #tpu.memory_space<vmem>>, vector<1x128xf32>
    %48 = vector.broadcast %47 : vector<1x128xf32> to vector<8x128xf32>
    %49 = arith.addf %46, %48 : vector<8x128xf32>
    %cst_33 = arith.constant 0.000000e+00 : f32
    %50 = vector.broadcast %cst_33 : f32 to vector<8x128xf32>
    %51 = arith.cmpf oge, %49, %50 : vector<8x128xf32>
    %cst_34 = arith.constant 2.000000e-01 : f32
    %52 = vector.broadcast %cst_34 : f32 to vector<8x128xf32>
    %53 = arith.mulf %52, %49 : vector<8x128xf32>
    %54 = arith.select %51, %49, %53 : vector<8x128xi1>, vector<8x128xf32>
    %c0_35 = arith.constant 0 : index
    %c0_36 = arith.constant 0 : index
    %55 = vector.load %arg12[%c0_35, %c0_36] : memref<8x128xf32, #tpu.memory_space<vmem>>, vector<8x128xf32>
    tpu.vector_store %arg12[%c0_35, %c0_36], %54 {strides = array<i32>} : memref<8x128xf32, #tpu.memory_space<vmem>>, vector<8x128xf32>,
    return
  }
  func.func @transform_0(%arg0: i32) -> (i32, i32) {
    %c0_i32 = arith.constant 0 : i32
    %c0_i32_0 = arith.constant 0 : i32
    return %arg0, %c0_i32 : i32, i32
  }
  func.func @transform_1(%arg0: i32) -> (i32, i32) {
    %c0_i32 = arith.constant 0 : i32
    %c0_i32_0 = arith.constant 0 : i32
    %c0_i32_1 = arith.constant 0 : i32
    return %c0_i32, %c0_i32_0 : i32, i32
  }
  func.func @transform_2(%arg0: i32) -> (i32, i32) {
    %c0_i32 = arith.constant 0 : i32
    %c0_i32_0 = arith.constant 0 : i32
    %c0_i32_1 = arith.constant 0 : i32
    return %c0_i32, %c0_i32_0 : i32, i32
  }
  func.func @transform_3(%arg0: i32) -> (i32, i32) {
    %c0_i32 = arith.constant 0 : i32
    %c0_i32_0 = arith.constant 0 : i32
    %c0_i32_1 = arith.constant 0 : i32
    return %c0_i32, %c0_i32_0 : i32, i32
  }
  func.func @transform_4(%arg0: i32) -> (i32, i32) {
    %c0_i32 = arith.constant 0 : i32
    %c0_i32_0 = arith.constant 0 : i32
    %c0_i32_1 = arith.constant 0 : i32
    return %c0_i32, %c0_i32_0 : i32, i32
  }
  func.func @transform_5(%arg0: i32) -> (i32, i32) {
    %c0_i32 = arith.constant 0 : i32
    %c0_i32_0 = arith.constant 0 : i32
    %c0_i32_1 = arith.constant 0 : i32
    return %c0_i32, %c0_i32_0 : i32, i32
  }
  func.func @transform_6(%arg0: i32) -> (i32, i32) {
    %c0_i32 = arith.constant 0 : i32
    %c0_i32_0 = arith.constant 0 : i32
    %c0_i32_1 = arith.constant 0 : i32
    return %c0_i32, %c0_i32_0 : i32, i32
  }
  func.func @transform_7(%arg0: i32) -> (i32, i32) {
    %c0_i32 = arith.constant 0 : i32
    %c0_i32_0 = arith.constant 0 : i32
    %c0_i32_1 = arith.constant 0 : i32
    return %c0_i32, %c0_i32_0 : i32, i32
  }
  func.func @transform_8(%arg0: i32) -> (i32, i32) {
    %c0_i32 = arith.constant 0 : i32
    %c0_i32_0 = arith.constant 0 : i32
    %c0_i32_1 = arith.constant 0 : i32
    return %c0_i32, %c0_i32_0 : i32, i32
  }
  func.func @transform_9(%arg0: i32) -> (i32, i32) {
    %c0_i32 = arith.constant 0 : i32
    %c0_i32_0 = arith.constant 0 : i32
    %c0_i32_1 = arith.constant 0 : i32
    return %c0_i32, %c0_i32_0 : i32, i32
  }
  func.func @transform_10(%arg0: i32) -> (i32, i32) {
    %c0_i32 = arith.constant 0 : i32
    %c0_i32_0 = arith.constant 0 : i32
    %c0_i32_1 = arith.constant 0 : i32
    return %c0_i32, %c0_i32_0 : i32, i32
  }
  func.func @transform_11(%arg0: i32) -> (i32, i32) {
    %c0_i32 = arith.constant 0 : i32
    %c0_i32_0 = arith.constant 0 : i32
    return %arg0, %c0_i32 : i32, i32
  }
}

</mosaic_0001>

<llo_original>
// kernel: _lambda_.1
$region0: #{_lambda_.1}
  #allocation0 [shape = 'u32[]', space=smem, size = 0x4, offset = 0x4, fixed_abs, tag = 'smem constant byte address 0x4 - core index']
  #allocation1 [shape = 'u32[144,128]{1,0:T(1,128)}', space=vmem, size = 0x12000, scoped, tag = 'internal scratch']
  %s0 = inlined_call_operand.vmem [shape: bf16[8,1024], index: 0, kind: input, shape index: {}]
  %s1 = inlined_call_operand.vmem [shape: bf16[1024,512], index: 1, kind: input, shape index: {}]
  %s2 = inlined_call_operand.vmem [shape: f32[1,512], index: 2, kind: input, shape index: {}]
  %s3 = inlined_call_operand.vmem [shape: bf16[512,256], index: 3, kind: input, shape index: {}]
  %s4 = inlined_call_operand.vmem [shape: f32[1,256], index: 4, kind: input, shape index: {}]
  %s5 = inlined_call_operand.vmem [shape: bf16[256,128], index: 5, kind: input, shape index: {}]
  %s6 = inlined_call_operand.vmem [shape: f32[1,128], index: 6, kind: input, shape index: {}]
  %s7 = inlined_call_operand.vmem [shape: bf16[128,128], index: 7, kind: input, shape index: {}]
  %s8 = inlined_call_operand.vmem [shape: f32[1,128], index: 8, kind: input, shape index: {}]
  %s9 = inlined_call_operand.vmem [shape: bf16[128,128], index: 9, kind: input, shape index: {}]
  %s10 = inlined_call_operand.vmem [shape: f32[1,128], index: 10, kind: input, shape index: {}]
  %s11 = inlined_call_operand.vmem [shape: f32[8,128], index: 11, kind: output, shape index: {}]
  %s12 = sld [smem:[#allocation0]]
  $region54: #{_lambda_.1} parent=0
    _
  %s14 = ssub.s32 1, %s12
  %s15 = scalar_select 0, %s14, %s12
  // Predicated region
  $region2: #{_lambda_.1} parent=0 // pred_check
    _
  $region3: #{_lambda_.1} parent=0 // pred_check_branch
    %17 = sbr.rel (0) target = $region5
  $region4: #{_lambda_.1} parent=0 // pred_region
    _
  $region5: #{_lambda_.1} parent=0 // pred_fallthru
    _
  // Predicated region
  $region6: #{_lambda_.1} parent=0 // pred_check
    _
  $region7: #{_lambda_.1} parent=0 // pred_check_branch
    %19 = sbr.rel (0) target = $region9
  $region8: #{_lambda_.1} parent=0 // pred_region
    _
  $region9: #{_lambda_.1} parent=0 // pred_fallthru
    _
  // Predicated region
  $region10: #{_lambda_.1} parent=0 // pred_check
    _
  $region11: #{_lambda_.1} parent=0 // pred_check_branch
    %21 = sbr.rel (0) target = $region13
  $region12: #{_lambda_.1} parent=0 // pred_region
    _
  $region13: #{_lambda_.1} parent=0 // pred_fallthru
    _
  // Predicated region
  $region14: #{_lambda_.1} parent=0 // pred_check
    _
  $region15: #{_lambda_.1} parent=0 // pred_check_branch
    %23 = sbr.rel (0) target = $region17
  $region16: #{_lambda_.1} parent=0 // pred_region
    _
  $region17: #{_lambda_.1} parent=0 // pred_fallthru
    _
  // Predicated region
  $region18: #{_lambda_.1} parent=0 // pred_check
    _
  $region19: #{_lambda_.1} parent=0 // pred_check_branch
    %25 = sbr.rel (0) target = $region21
  $region20: #{_lambda_.1} parent=0 // pred_region
    _
  $region21: #{_lambda_.1} parent=0 // pred_fallthru
    _
  // Predicated region
  $region22: #{_lambda_.1} parent=0 // pred_check
    _
  $region23: #{_lambda_.1} parent=0 // pred_check_branch
    %27 = sbr.rel (0) target = $region25
  $region24: #{_lambda_.1} parent=0 // pred_region
    _
  $region25: #{_lambda_.1} parent=0 // pred_fallthru
    _
  // Predicated region
  $region26: #{_lambda_.1} parent=0 // pred_check
    _
  $region27: #{_lambda_.1} parent=0 // pred_check_branch
    %29 = sbr.rel (0) target = $region29
  $region28: #{_lambda_.1} parent=0 // pred_region
    _
  $region29: #{_lambda_.1} parent=0 // pred_fallthru
    _
  // Predicated region
  $region30: #{_lambda_.1} parent=0 // pred_check
    _
  $region31: #{_lambda_.1} parent=0 // pred_check_branch
    %31 = sbr.rel (0) target = $region33
  $region32: #{_lambda_.1} parent=0 // pred_region
    _
  $region33: #{_lambda_.1} parent=0 // pred_fallthru
    _
  // Predicated region
  $region34: #{_lambda_.1} parent=0 // pred_check
    _
  $region35: #{_lambda_.1} parent=0 // pred_check_branch
    %33 = sbr.rel (0) target = $region37
  $region36: #{_lambda_.1} parent=0 // pred_region
    _
  $region37: #{_lambda_.1} parent=0 // pred_fallthru
    _
  // Predicated region
  $region38: #{_lambda_.1} parent=0 // pred_check
    _
  $region39: #{_lambda_.1} parent=0 // pred_check_branch
    %35 = sbr.rel (0) target = $region41
  $region40: #{_lambda_.1} parent=0 // pred_region
    _
  $region41: #{_lambda_.1} parent=0 // pred_fallthru
    _
  // Predicated region
  $region42: #{_lambda_.1} parent=0 // pred_check
    _
  $region43: #{_lambda_.1} parent=0 // pred_check_branch
    %37 = sbr.rel (0) target = $region45
  $region44: #{_lambda_.1} parent=0 // pred_region
    _
  $region45: #{_lambda_.1} parent=0 // pred_fallthru
    _
  %v39 = vld [vmem:[%s0] sm:$0xff]
  %v40 = vld [vmem:[%s0 + $0x8] sm:$0xff]
  %v41 = vld [vmem:[%s0 + $0x10] sm:$0xff]
  %v42 = vld [vmem:[%s0 + $0x18] sm:$0xff]
  %v43 = vld [vmem:[%s1] sm:$0xff]
  %v44 = vld [vmem:[%s1 + $0x8] sm:$0xff]
  %v45 = vld [vmem:[%s1 + $0x10] sm:$0xff]
  %v46 = vld [vmem:[%s1 + $0x18] sm:$0xff]
  %v47 = vld [vmem:[%s1 + $0x20] sm:$0xff]
  %v48 = vld [vmem:[%s1 + $0x28] sm:$0xff]
  %v49 = vld [vmem:[%s1 + $0x30] sm:$0xff]
  %v50 = vld [vmem:[%s1 + $0x38] sm:$0xff]
  %v51 = vld [vmem:[%s1 + $0x40] sm:$0xff]
  %v52 = vld [vmem:[%s1 + $0x48] sm:$0xff]
  %v53 = vld [vmem:[%s1 + $0x50] sm:$0xff]
  %v54 = vld [vmem:[%s1 + $0x58] sm:$0xff]
  %v55 = vld [vmem:[%s1 + $0x60] sm:$0xff]
  %v56 = vld [vmem:[%s1 + $0x68] sm:$0xff]
  %v57 = vld [vmem:[%s1 + $0x70] sm:$0xff]
  %v58 = vld [vmem:[%s1 + $0x78] sm:$0xff]
  %v59 = vld [vmem:[%s1 + $0x80] sm:$0xff]
  %v60 = vld [vmem:[%s1 + $0x88] sm:$0xff]
  %v61 = vld [vmem:[%s1 + $0x90] sm:$0xff]
  %v62 = vld [vmem:[%s1 + $0x98] sm:$0xff]
  %v63 = vld [vmem:[%s1 + $0xa0] sm:$0xff]
  %v64 = vld [vmem:[%s1 + $0xa8] sm:$0xff]
  %v65 = vld [vmem:[%s1 + $0xb0] sm:$0xff]
  %v66 = vld [vmem:[%s1 + $0xb8] sm:$0xff]
  %v67 = vld [vmem:[%s1 + $0xc0] sm:$0xff]
  %v68 = vld [vmem:[%s1 + $0xc8] sm:$0xff]
  %v69 = vld [vmem:[%s1 + $0xd0] sm:$0xff]
  %v70 = vld [vmem:[%s1 + $0xd8] sm:$0xff]
  %v71 = vld [vmem:[%s1 + $0xe0] sm:$0xff]
  %v72 = vld [vmem:[%s1 + $0xe8] sm:$0xff]
  %v73 = vld [vmem:[%s1 + $0xf0] sm:$0xff]
  %v74 = vld [vmem:[%s1 + $0xf8] sm:$0xff]
  %v75 = vld [vmem:[%s1 + $0x100] sm:$0xff]
  %v76 = vld [vmem:[%s1 + $0x108] sm:$0xff]
  %v77 = vld [vmem:[%s1 + $0x110] sm:$0xff]
  %v78 = vld [vmem:[%s1 + $0x118] sm:$0xff]
  %v79 = vld [vmem:[%s1 + $0x120] sm:$0xff]
  %v80 = vld [vmem:[%s1 + $0x128] sm:$0xff]
  %v81 = vld [vmem:[%s1 + $0x130] sm:$0xff]
  %v82 = vld [vmem:[%s1 + $0x138] sm:$0xff]
  %v83 = vld [vmem:[%s1 + $0x140] sm:$0xff]
  %v84 = vld [vmem:[%s1 + $0x148] sm:$0xff]
  %v85 = vld [vmem:[%s1 + $0x150] sm:$0xff]
  %v86 = vld [vmem:[%s1 + $0x158] sm:$0xff]
  %v87 = vld [vmem:[%s1 + $0x160] sm:$0xff]
  %v88 = vld [vmem:[%s1 + $0x168] sm:$0xff]
  %v89 = vld [vmem:[%s1 + $0x170] sm:$0xff]
  %v90 = vld [vmem:[%s1 + $0x178] sm:$0xff]
  %v91 = vld [vmem:[%s1 + $0x180] sm:$0xff]
  %v92 = vld [vmem:[%s1 + $0x188] sm:$0xff]
  %v93 = vld [vmem:[%s1 + $0x190] sm:$0xff]
  %v94 = vld [vmem:[%s1 + $0x198] sm:$0xff]
  %v95 = vld [vmem:[%s1 + $0x1a0] sm:$0xff]
  %v96 = vld [vmem:[%s1 + $0x1a8] sm:$0xff]
  %v97 = vld [vmem:[%s1 + $0x1b0] sm:$0xff]
  %v98 = vld [vmem:[%s1 + $0x1b8] sm:$0xff]
  %v99 = vld [vmem:[%s1 + $0x1c0] sm:$0xff]
  %v100 = vld [vmem:[%s1 + $0x1c8] sm:$0xff]
  %v101 = vld [vmem:[%s1 + $0x1d0] sm:$0xff]
  %v102 = vld [vmem:[%s1 + $0x1d8] sm:$0xff]
  %v103 = vld [vmem:[%s1 + $0x1e0] sm:$0xff]
  %v104 = vld [vmem:[%s1 + $0x1e8] sm:$0xff]
  %v105 = vld [vmem:[%s1 + $0x1f0] sm:$0xff]
  %v106 = vld [vmem:[%s1 + $0x1f8] sm:$0xff]
  %v107 = vld [vmem:[%s1 + $0x200] sm:$0xff]
  %v108 = vld [vmem:[%s1 + $0x208] sm:$0xff]
  %v109 = vld [vmem:[%s1 + $0x210] sm:$0xff]
  %v110 = vld [vmem:[%s1 + $0x218] sm:$0xff]
  %v111 = vld [vmem:[%s1 + $0x220] sm:$0xff]
  %v112 = vld [vmem:[%s1 + $0x228] sm:$0xff]
  %v113 = vld [vmem:[%s1 + $0x230] sm:$0xff]
  %v114 = vld [vmem:[%s1 + $0x238] sm:$0xff]
  %v115 = vld [vmem:[%s1 + $0x240] sm:$0xff]
  %v116 = vld [vmem:[%s1 + $0x248] sm:$0xff]
  %v117 = vld [vmem:[%s1 + $0x250] sm:$0xff]
  %v118 = vld [vmem:[%s1 + $0x258] sm:$0xff]
  %v119 = vld [vmem:[%s1 + $0x260] sm:$0xff]
  %v120 = vld [vmem:[%s1 + $0x268] sm:$0xff]
  %v121 = vld [vmem:[%s1 + $0x270] sm:$0xff]
  %v122 = vld [vmem:[%s1 + $0x278] sm:$0xff]
  %v123 = vld [vmem:[%s1 + $0x280] sm:$0xff]
  %v124 = vld [vmem:[%s1 + $0x288] sm:$0xff]
  %v125 = vld [vmem:[%s1 + $0x290] sm:$0xff]
  %v126 = vld [vmem:[%s1 + $0x298] sm:$0xff]
  %v127 = vld [vmem:[%s1 + $0x2a0] sm:$0xff]
  %v128 = vld [vmem:[%s1 + $0x2a8] sm:$0xff]
  %v129 = vld [vmem:[%s1 + $0x2b0] sm:$0xff]
  %v130 = vld [vmem:[%s1 + $0x2b8] sm:$0xff]
  %v131 = vld [vmem:[%s1 + $0x2c0] sm:$0xff]
  %v132 = vld [vmem:[%s1 + $0x2c8] sm:$0xff]
  %v133 = vld [vmem:[%s1 + $0x2d0] sm:$0xff]
  %v134 = vld [vmem:[%s1 + $0x2d8] sm:$0xff]
  %v135 = vld [vmem:[%s1 + $0x2e0] sm:$0xff]
  %v136 = vld [vmem:[%s1 + $0x2e8] sm:$0xff]
  %v137 = vld [vmem:[%s1 + $0x2f0] sm:$0xff]
  %v138 = vld [vmem:[%s1 + $0x2f8] sm:$0xff]
  %v139 = vld [vmem:[%s1 + $0x300] sm:$0xff]
  %v140 = vld [vmem:[%s1 + $0x308] sm:$0xff]
  %v141 = vld [vmem:[%s1 + $0x310] sm:$0xff]
  %v142 = vld [vmem:[%s1 + $0x318] sm:$0xff]
  %v143 = vld [vmem:[%s1 + $0x320] sm:$0xff]
  %v144 = vld [vmem:[%s1 + $0x328] sm:$0xff]
  %v145 = vld [vmem:[%s1 + $0x330] sm:$0xff]
  %v146 = vld [vmem:[%s1 + $0x338] sm:$0xff]
  %v147 = vld [vmem:[%s1 + $0x340] sm:$0xff]
  %v148 = vld [vmem:[%s1 + $0x348] sm:$0xff]
  %v149 = vld [vmem:[%s1 + $0x350] sm:$0xff]
  %v150 = vld [vmem:[%s1 + $0x358] sm:$0xff]
  %v151 = vld [vmem:[%s1 + $0x360] sm:$0xff]
  %v152 = vld [vmem:[%s1 + $0x368] sm:$0xff]
  %v153 = vld [vmem:[%s1 + $0x370] sm:$0xff]
  %v154 = vld [vmem:[%s1 + $0x378] sm:$0xff]
  %v155 = vld [vmem:[%s1 + $0x380] sm:$0xff]
  %v156 = vld [vmem:[%s1 + $0x388] sm:$0xff]
  %v157 = vld [vmem:[%s1 + $0x390] sm:$0xff]
  %v158 = vld [vmem:[%s1 + $0x398] sm:$0xff]
  %v159 = vld [vmem:[%s1 + $0x3a0] sm:$0xff]
  %v160 = vld [vmem:[%s1 + $0x3a8] sm:$0xff]
  %v161 = vld [vmem:[%s1 + $0x3b0] sm:$0xff]
  %v162 = vld [vmem:[%s1 + $0x3b8] sm:$0xff]
  %v163 = vld [vmem:[%s1 + $0x3c0] sm:$0xff]
  %v164 = vld [vmem:[%s1 + $0x3c8] sm:$0xff]
  %v165 = vld [vmem:[%s1 + $0x3d0] sm:$0xff]
  %v166 = vld [vmem:[%s1 + $0x3d8] sm:$0xff]
  %v167 = vld [vmem:[%s1 + $0x3e0] sm:$0xff]
  %v168 = vld [vmem:[%s1 + $0x3e8] sm:$0xff]
  %v169 = vld [vmem:[%s1 + $0x3f0] sm:$0xff]
  %v170 = vld [vmem:[%s1 + $0x3f8] sm:$0xff]
  %v171 = vld [vmem:[%s1 + $0x400] sm:$0xff]
  %v172 = vld [vmem:[%s1 + $0x408] sm:$0xff]
  %v173 = vld [vmem:[%s1 + $0x410] sm:$0xff]
  %v174 = vld [vmem:[%s1 + $0x418] sm:$0xff]
  %v175 = vld [vmem:[%s1 + $0x420] sm:$0xff]
  %v176 = vld [vmem:[%s1 + $0x428] sm:$0xff]
  %v177 = vld [vmem:[%s1 + $0x430] sm:$0xff]
  %v178 = vld [vmem:[%s1 + $0x438] sm:$0xff]
  %v179 = vld [vmem:[%s1 + $0x440] sm:$0xff]
  %v180 = vld [vmem:[%s1 + $0x448] sm:$0xff]
  %v181 = vld [vmem:[%s1 + $0x450] sm:$0xff]
  %v182 = vld [vmem:[%s1 + $0x458] sm:$0xff]
  %v183 = vld [vmem:[%s1 + $0x460] sm:$0xff]
  %v184 = vld [vmem:[%s1 + $0x468] sm:$0xff]
  %v185 = vld [vmem:[%s1 + $0x470] sm:$0xff]
  %v186 = vld [vmem:[%s1 + $0x478] sm:$0xff]
  %v187 = vld [vmem:[%s1 + $0x480] sm:$0xff]
  %v188 = vld [vmem:[%s1 + $0x488] sm:$0xff]
  %v189 = vld [vmem:[%s1 + $0x490] sm:$0xff]
  %v190 = vld [vmem:[%s1 + $0x498] sm:$0xff]
  %v191 = vld [vmem:[%s1 + $0x4a0] sm:$0xff]
  %v192 = vld [vmem:[%s1 + $0x4a8] sm:$0xff]
  %v193 = vld [vmem:[%s1 + $0x4b0] sm:$0xff]
  %v194 = vld [vmem:[%s1 + $0x4b8] sm:$0xff]
  %v195 = vld [vmem:[%s1 + $0x4c0] sm:$0xff]
  %v196 = vld [vmem:[%s1 + $0x4c8] sm:$0xff]
  %v197 = vld [vmem:[%s1 + $0x4d0] sm:$0xff]
  %v198 = vld [vmem:[%s1 + $0x4d8] sm:$0xff]
  %v199 = vld [vmem:[%s1 + $0x4e0] sm:$0xff]
  %v200 = vld [vmem:[%s1 + $0x4e8] sm:$0xff]
  %v201 = vld [vmem:[%s1 + $0x4f0] sm:$0xff]
  %v202 = vld [vmem:[%s1 + $0x4f8] sm:$0xff]
  %v203 = vld [vmem:[%s1 + $0x500] sm:$0xff]
  %v204 = vld [vmem:[%s1 + $0x508] sm:$0xff]
  %v205 = vld [vmem:[%s1 + $0x510] sm:$0xff]
  %v206 = vld [vmem:[%s1 + $0x518] sm:$0xff]
  %v207 = vld [vmem:[%s1 + $0x520] sm:$0xff]
  %v208 = vld [vmem:[%s1 + $0x528] sm:$0xff]
  %v209 = vld [vmem:[%s1 + $0x530] sm:$0xff]
  %v210 = vld [vmem:[%s1 + $0x538] sm:$0xff]
  %v211 = vld [vmem:[%s1 + $0x540] sm:$0xff]
  %v212 = vld [vmem:[%s1 + $0x548] sm:$0xff]
  %v213 = vld [vmem:[%s1 + $0x550] sm:$0xff]
  %v214 = vld [vmem:[%s1 + $0x558] sm:$0xff]
  %v215 = vld [vmem:[%s1 + $0x560] sm:$0xff]
  %v216 = vld [vmem:[%s1 + $0x568] sm:$0xff]
  %v217 = vld [vmem:[%s1 + $0x570] sm:$0xff]
  %v218 = vld [vmem:[%s1 + $0x578] sm:$0xff]
  %v219 = vld [vmem:[%s1 + $0x580] sm:$0xff]
  %v220 = vld [vmem:[%s1 + $0x588] sm:$0xff]
  %v221 = vld [vmem:[%s1 + $0x590] sm:$0xff]
  %v222 = vld [vmem:[%s1 + $0x598] sm:$0xff]
  %v223 = vld [vmem:[%s1 + $0x5a0] sm:$0xff]
  %v224 = vld [vmem:[%s1 + $0x5a8] sm:$0xff]
  %v225 = vld [vmem:[%s1 + $0x5b0] sm:$0xff]
  %v226 = vld [vmem:[%s1 + $0x5b8] sm:$0xff]
  %v227 = vld [vmem:[%s1 + $0x5c0] sm:$0xff]
  %v228 = vld [vmem:[%s1 + $0x5c8] sm:$0xff]
  %v229 = vld [vmem:[%s1 + $0x5d0] sm:$0xff]
  %v230 = vld [vmem:[%s1 + $0x5d8] sm:$0xff]
  %v231 = vld [vmem:[%s1 + $0x5e0] sm:$0xff]
  %v232 = vld [vmem:[%s1 + $0x5e8] sm:$0xff]
  %v233 = vld [vmem:[%s1 + $0x5f0] sm:$0xff]
  %v234 = vld [vmem:[%s1 + $0x5f8] sm:$0xff]
  %v235 = vld [vmem:[%s1 + $0x600] sm:$0xff]
  %v236 = vld [vmem:[%s1 + $0x608] sm:$0xff]
  %v237 = vld [vmem:[%s1 + $0x610] sm:$0xff]
  %v238 = vld [vmem:[%s1 + $0x618] sm:$0xff]
  %v239 = vld [vmem:[%s1 + $0x620] sm:$0xff]
  %v240 = vld [vmem:[%s1 + $0x628] sm:$0xff]
  %v241 = vld [vmem:[%s1 + $0x630] sm:$0xff]
  %v242 = vld [vmem:[%s1 + $0x638] sm:$0xff]
  %v243 = vld [vmem:[%s1 + $0x640] sm:$0xff]
  %v244 = vld [vmem:[%s1 + $0x648] sm:$0xff]
  %v245 = vld [vmem:[%s1 + $0x650] sm:$0xff]
  %v246 = vld [vmem:[%s1 + $0x658] sm:$0xff]
  %v247 = vld [vmem:[%s1 + $0x660] sm:$0xff]
  %v248 = vld [vmem:[%s1 + $0x668] sm:$0xff]
  %v249 = vld [vmem:[%s1 + $0x670] sm:$0xff]
  %v250 = vld [vmem:[%s1 + $0x678] sm:$0xff]
  %v251 = vld [vmem:[%s1 + $0x680] sm:$0xff]
  %v252 = vld [vmem:[%s1 + $0x688] sm:$0xff]
  %v253 = vld [vmem:[%s1 + $0x690] sm:$0xff]
  %v254 = vld [vmem:[%s1 + $0x698] sm:$0xff]
  %v255 = vld [vmem:[%s1 + $0x6a0] sm:$0xff]
  %v256 = vld [vmem:[%s1 + $0x6a8] sm:$0xff]
  %v257 = vld [vmem:[%s1 + $0x6b0] sm:$0xff]
  %v258 = vld [vmem:[%s1 + $0x6b8] sm:$0xff]
  %v259 = vld [vmem:[%s1 + $0x6c0] sm:$0xff]
  %v260 = vld [vmem:[%s1 + $0x6c8] sm:$0xff]
  %v261 = vld [vmem:[%s1 + $0x6d0] sm:$0xff]
  %v262 = vld [vmem:[%s1 + $0x6d8] sm:$0xff]
  %v263 = vld [vmem:[%s1 + $0x6e0] sm:$0xff]
  %v264 = vld [vmem:[%s1 + $0x6e8] sm:$0xff]
  %v265 = vld [vmem:[%s1 + $0x6f0] sm:$0xff]
  %v266 = vld [vmem:[%s1 + $0x6f8] sm:$0xff]
  %v267 = vld [vmem:[%s1 + $0x700] sm:$0xff]
  %v268 = vld [vmem:[%s1 + $0x708] sm:$0xff]
  %v269 = vld [vmem:[%s1 + $0x710] sm:$0xff]
  %v270 = vld [vmem:[%s1 + $0x718] sm:$0xff]
  %v271 = vld [vmem:[%s1 + $0x720] sm:$0xff]
  %v272 = vld [vmem:[%s1 + $0x728] sm:$0xff]
  %v273 = vld [vmem:[%s1 + $0x730] sm:$0xff]
  %v274 = vld [vmem:[%s1 + $0x738] sm:$0xff]
  %v275 = vld [vmem:[%s1 + $0x740] sm:$0xff]
  %v276 = vld [vmem:[%s1 + $0x748] sm:$0xff]
  %v277 = vld [vmem:[%s1 + $0x750] sm:$0xff]
  %v278 = vld [vmem:[%s1 + $0x758] sm:$0xff]
  %v279 = vld [vmem:[%s1 + $0x760] sm:$0xff]
  %v280 = vld [vmem:[%s1 + $0x768] sm:$0xff]
  %v281 = vld [vmem:[%s1 + $0x770] sm:$0xff]
  %v282 = vld [vmem:[%s1 + $0x778] sm:$0xff]
  %v283 = vld [vmem:[%s1 + $0x780] sm:$0xff]
  %v284 = vld [vmem:[%s1 + $0x788] sm:$0xff]
  %v285 = vld [vmem:[%s1 + $0x790] sm:$0xff]
  %v286 = vld [vmem:[%s1 + $0x798] sm:$0xff]
  %v287 = vld [vmem:[%s1 + $0x7a0] sm:$0xff]
  %v288 = vld [vmem:[%s1 + $0x7a8] sm:$0xff]
  %v289 = vld [vmem:[%s1 + $0x7b0] sm:$0xff]
  %v290 = vld [vmem:[%s1 + $0x7b8] sm:$0xff]
  %v291 = vld [vmem:[%s1 + $0x7c0] sm:$0xff]
  %v292 = vld [vmem:[%s1 + $0x7c8] sm:$0xff]
  %v293 = vld [vmem:[%s1 + $0x7d0] sm:$0xff]
  %v294 = vld [vmem:[%s1 + $0x7d8] sm:$0xff]
  %v295 = vld [vmem:[%s1 + $0x7e0] sm:$0xff]
  %v296 = vld [vmem:[%s1 + $0x7e8] sm:$0xff]
  %v297 = vld [vmem:[%s1 + $0x7f0] sm:$0xff]
  %v298 = vld [vmem:[%s1 + $0x7f8] sm:$0xff]
  %v299 = vld [vmem:[%s2] sm:$0xf]
  %v301 = vlaneseq
  %v302 = vshrl.u32 %v301, 7
  %v303 = vsub.s32 0, %v302
  %v304 = vrot.slane %v299, %v303
  %v305 = vlaneseq
  %v306 = vshrl.u32 %v305, 7
  %v307 = vsub.s32 1, %v306
  %v308 = vrot.slane %v299, %v307
  %v309 = vlaneseq
  %v310 = vshrl.u32 %v309, 7
  %v311 = vsub.s32 2, %v310
  %v312 = vrot.slane %v299, %v311
  %v313 = vlaneseq
  %v314 = vshrl.u32 %v313, 7
  %v315 = vsub.s32 3, %v314
  %v316 = vrot.slane %v299, %v315
  %v325 = vunpack.c.l.b16 %v39
  %v326 = vunpack.c.h.b16 %v39
  %v327 = vunpack.c.l.b16 %v40
  %v328 = vunpack.c.h.b16 %v40
  %v329 = vunpack.c.l.b16 %v41
  %v330 = vunpack.c.h.b16 %v41
  %v331 = vunpack.c.l.b16 %v42
  %v332 = vunpack.c.h.b16 %v42
  %v333 = vpack.c.b16 %v325, %v325
  %v334 = vpack.c.b16 %v326, %v326
  %v335 = vpack.c.b16 %v327, %v327
  %v336 = vpack.c.b16 %v328, %v328
  %v337 = vpack.c.b16 %v329, %v329
  %v338 = vpack.c.b16 %v330, %v330
  %v339 = vpack.c.b16 %v331, %v331
  %v340 = vpack.c.b16 %v332, %v332
  %v605 = vunpack.c.l.b16 %v43
  %v606 = vunpack.c.h.b16 %v43
  %v607 = vunpack.c.l.b16 %v44
  %v608 = vunpack.c.h.b16 %v44
  %v609 = vunpack.c.l.b16 %v45
  %v610 = vunpack.c.h.b16 %v45
  %v611 = vunpack.c.l.b16 %v46
  %v612 = vunpack.c.h.b16 %v46
  %v613 = vunpack.c.l.b16 %v47
  %v614 = vunpack.c.h.b16 %v47
  %v615 = vunpack.c.l.b16 %v48
  %v616 = vunpack.c.h.b16 %v48
  %v617 = vunpack.c.l.b16 %v49
  %v618 = vunpack.c.h.b16 %v49
  %v619 = vunpack.c.l.b16 %v50
  %v620 = vunpack.c.h.b16 %v50
  %v621 = vunpack.c.l.b16 %v51
  %v622 = vunpack.c.h.b16 %v51
  %v623 = vunpack.c.l.b16 %v52
  %v624 = vunpack.c.h.b16 %v52
  %v625 = vunpack.c.l.b16 %v53
  %v626 = vunpack.c.h.b16 %v53
  %v627 = vunpack.c.l.b16 %v54
  %v628 = vunpack.c.h.b16 %v54
  %v629 = vunpack.c.l.b16 %v55
  %v630 = vunpack.c.h.b16 %v55
  %v631 = vunpack.c.l.b16 %v56
  %v632 = vunpack.c.h.b16 %v56
  %v633 = vunpack.c.l.b16 %v57
  %v634 = vunpack.c.h.b16 %v57
  %v635 = vunpack.c.l.b16 %v58
  %v636 = vunpack.c.h.b16 %v58
  %v637 = vunpack.c.l.b16 %v59
  %v638 = vunpack.c.h.b16 %v59
  %v639 = vunpack.c.l.b16 %v60
  %v640 = vunpack.c.h.b16 %v60
  %v641 = vunpack.c.l.b16 %v61
  %v642 = vunpack.c.h.b16 %v61
  %v643 = vunpack.c.l.b16 %v62
  %v644 = vunpack.c.h.b16 %v62
  %v645 = vunpack.c.l.b16 %v63
  %v646 = vunpack.c.h.b16 %v63
  %v647 = vunpack.c.l.b16 %v64
  %v648 = vunpack.c.h.b16 %v64
  %v649 = vunpack.c.l.b16 %v65
  %v650 = vunpack.c.h.b16 %v65
  %v651 = vunpack.c.l.b16 %v66
  %v652 = vunpack.c.h.b16 %v66
  %v653 = vunpack.c.l.b16 %v67
  %v654 = vunpack.c.h.b16 %v67
  %v655 = vunpack.c.l.b16 %v68
  %v656 = vunpack.c.h.b16 %v68
  %v657 = vunpack.c.l.b16 %v69
  %v658 = vunpack.c.h.b16 %v69
  %v659 = vunpack.c.l.b16 %v70
  %v660 = vunpack.c.h.b16 %v70
  %v661 = vunpack.c.l.b16 %v71
  %v662 = vunpack.c.h.b16 %v71
  %v663 = vunpack.c.l.b16 %v72
  %v664 = vunpack.c.h.b16 %v72
  %v665 = vunpack.c.l.b16 %v73
  %v666 = vunpack.c.h.b16 %v73
  %v667 = vunpack.c.l.b16 %v74
  %v668 = vunpack.c.h.b16 %v74
  %v669 = vunpack.c.l.b16 %v75
  %v670 = vunpack.c.h.b16 %v75
  %v671 = vunpack.c.l.b16 %v76
  %v672 = vunpack.c.h.b16 %v76
  %v673 = vunpack.c.l.b16 %v77
  %v674 = vunpack.c.h.b16 %v77
  %v675 = vunpack.c.l.b16 %v78
  %v676 = vunpack.c.h.b16 %v78
  %v677 = vunpack.c.l.b16 %v79
  %v678 = vunpack.c.h.b16 %v79
  %v679 = vunpack.c.l.b16 %v80
  %v680 = vunpack.c.h.b16 %v80
  %v681 = vunpack.c.l.b16 %v81
  %v682 = vunpack.c.h.b16 %v81
  %v683 = vunpack.c.l.b16 %v82
  %v684 = vunpack.c.h.b16 %v82
  %v685 = vunpack.c.l.b16 %v83
  %v686 = vunpack.c.h.b16 %v83
  %v687 = vunpack.c.l.b16 %v84
  %v688 = vunpack.c.h.b16 %v84
  %v689 = vunpack.c.l.b16 %v85
  %v690 = vunpack.c.h.b16 %v85
  %v691 = vunpack.c.l.b16 %v86
  %v692 = vunpack.c.h.b16 %v86
  %v693 = vunpack.c.l.b16 %v87
  %v694 = vunpack.c.h.b16 %v87
  %v695 = vunpack.c.l.b16 %v88
  %v696 = vunpack.c.h.b16 %v88
  %v697 = vunpack.c.l.b16 %v89
  %v698 = vunpack.c.h.b16 %v89
  %v699 = vunpack.c.l.b16 %v90
  %v700 = vunpack.c.h.b16 %v90
  %v701 = vunpack.c.l.b16 %v91
  %v702 = vunpack.c.h.b16 %v91
  %v703 = vunpack.c.l.b16 %v92
  %v704 = vunpack.c.h.b16 %v92
  %v705 = vunpack.c.l.b16 %v93
  %v706 = vunpack.c.h.b16 %v93
  %v707 = vunpack.c.l.b16 %v94
  %v708 = vunpack.c.h.b16 %v94
  %v709 = vunpack.c.l.b16 %v95
  %v710 = vunpack.c.h.b16 %v95
  %v711 = vunpack.c.l.b16 %v96
  %v712 = vunpack.c.h.b16 %v96
  %v713 = vunpack.c.l.b16 %v97
  %v714 = vunpack.c.h.b16 %v97
  %v715 = vunpack.c.l.b16 %v98
  %v716 = vunpack.c.h.b16 %v98
  %v717 = vunpack.c.l.b16 %v99
  %v718 = vunpack.c.h.b16 %v99
  %v719 = vunpack.c.l.b16 %v100
  %v720 = vunpack.c.h.b16 %v100
  %v721 = vunpack.c.l.b16 %v101
  %v722 = vunpack.c.h.b16 %v101
  %v723 = vunpack.c.l.b16 %v102
  %v724 = vunpack.c.h.b16 %v102
  %v725 = vunpack.c.l.b16 %v103
  %v726 = vunpack.c.h.b16 %v103
  %v727 = vunpack.c.l.b16 %v104
  %v728 = vunpack.c.h.b16 %v104
  %v729 = vunpack.c.l.b16 %v105
  %v730 = vunpack.c.h.b16 %v105
  %v731 = vunpack.c.l.b16 %v106
  %v732 = vunpack.c.h.b16 %v106
  %v733 = vunpack.c.l.b16 %v107
  %v734 = vunpack.c.h.b16 %v107
  %v735 = vunpack.c.l.b16 %v108
  %v736 = vunpack.c.h.b16 %v108
  %v737 = vunpack.c.l.b16 %v109
  %v738 = vunpack.c.h.b16 %v109
  %v739 = vunpack.c.l.b16 %v110
  %v740 = vunpack.c.h.b16 %v110
  %v741 = vunpack.c.l.b16 %v111
  %v742 = vunpack.c.h.b16 %v111
  %v743 = vunpack.c.l.b16 %v112
  %v744 = vunpack.c.h.b16 %v112
  %v745 = vunpack.c.l.b16 %v113
  %v746 = vunpack.c.h.b16 %v113
  %v747 = vunpack.c.l.b16 %v114
  %v748 = vunpack.c.h.b16 %v114
  %v749 = vunpack.c.l.b16 %v115
  %v750 = vunpack.c.h.b16 %v115
  %v751 = vunpack.c.l.b16 %v116
  %v752 = vunpack.c.h.b16 %v116
  %v753 = vunpack.c.l.b16 %v117
  %v754 = vunpack.c.h.b16 %v117
  %v755 = vunpack.c.l.b16 %v118
  %v756 = vunpack.c.h.b16 %v118
  %v757 = vunpack.c.l.b16 %v119
  %v758 = vunpack.c.h.b16 %v119
  %v759 = vunpack.c.l.b16 %v120
  %v760 = vunpack.c.h.b16 %v120
  %v761 = vunpack.c.l.b16 %v121
  %v762 = vunpack.c.h.b16 %v121
  %v763 = vunpack.c.l.b16 %v122
  %v764 = vunpack.c.h.b16 %v122
  %v765 = vunpack.c.l.b16 %v123
  %v766 = vunpack.c.h.b16 %v123
  %v767 = vunpack.c.l.b16 %v124
  %v768 = vunpack.c.h.b16 %v124
  %v769 = vunpack.c.l.b16 %v125
  %v770 = vunpack.c.h.b16 %v125
  %v771 = vunpack.c.l.b16 %v126
  %v772 = vunpack.c.h.b16 %v126
  %v773 = vunpack.c.l.b16 %v127
  %v774 = vunpack.c.h.b16 %v127
  %v775 = vunpack.c.l.b16 %v128
  %v776 = vunpack.c.h.b16 %v128
  %v777 = vunpack.c.l.b16 %v129
  %v778 = vunpack.c.h.b16 %v129
  %v779 = vunpack.c.l.b16 %v130
  %v780 = vunpack.c.h.b16 %v130
  %v781 = vunpack.c.l.b16 %v131
  %v782 = vunpack.c.h.b16 %v131
  %v783 = vunpack.c.l.b16 %v132
  %v784 = vunpack.c.h.b16 %v132
  %v785 = vunpack.c.l.b16 %v133
  %v786 = vunpack.c.h.b16 %v133
  %v787 = vunpack.c.l.b16 %v134
  %v788 = vunpack.c.h.b16 %v134
  %v789 = vunpack.c.l.b16 %v135
  %v790 = vunpack.c.h.b16 %v135
  %v791 = vunpack.c.l.b16 %v136
  %v792 = vunpack.c.h.b16 %v136
  %v793 = vunpack.c.l.b16 %v137
  %v794 = vunpack.c.h.b16 %v137
  %v795 = vunpack.c.l.b16 %v138
  %v796 = vunpack.c.h.b16 %v138
  %v797 = vunpack.c.l.b16 %v139
  %v798 = vunpack.c.h.b16 %v139
  %v799 = vunpack.c.l.b16 %v140
  %v800 = vunpack.c.h.b16 %v140
  %v801 = vunpack.c.l.b16 %v141
  %v802 = vunpack.c.h.b16 %v141
  %v803 = vunpack.c.l.b16 %v142
  %v804 = vunpack.c.h.b16 %v142
  %v805 = vunpack.c.l.b16 %v143
  %v806 = vunpack.c.h.b16 %v143
  %v807 = vunpack.c.l.b16 %v144
  %v808 = vunpack.c.h.b16 %v144
  %v809 = vunpack.c.l.b16 %v145
  %v810 = vunpack.c.h.b16 %v145
  %v811 = vunpack.c.l.b16 %v146
  %v812 = vunpack.c.h.b16 %v146
  %v813 = vunpack.c.l.b16 %v147
  %v814 = vunpack.c.h.b16 %v147
  %v815 = vunpack.c.l.b16 %v148
  %v816 = vunpack.c.h.b16 %v148
  %v817 = vunpack.c.l.b16 %v149
  %v818 = vunpack.c.h.b16 %v149
  %v819 = vunpack.c.l.b16 %v150
  %v820 = vunpack.c.h.b16 %v150
  %v821 = vunpack.c.l.b16 %v151
  %v822 = vunpack.c.h.b16 %v151
  %v823 = vunpack.c.l.b16 %v152
  %v824 = vunpack.c.h.b16 %v152
  %v825 = vunpack.c.l.b16 %v153
  %v826 = vunpack.c.h.b16 %v153
  %v827 = vunpack.c.l.b16 %v154
  %v828 = vunpack.c.h.b16 %v154
  %v829 = vunpack.c.l.b16 %v155
  %v830 = vunpack.c.h.b16 %v155
  %v831 = vunpack.c.l.b16 %v156
  %v832 = vunpack.c.h.b16 %v156
  %v833 = vunpack.c.l.b16 %v157
  %v834 = vunpack.c.h.b16 %v157
  %v835 = vunpack.c.l.b16 %v158
  %v836 = vunpack.c.h.b16 %v158
  %v837 = vunpack.c.l.b16 %v159
  %v838 = vunpack.c.h.b16 %v159
  %v839 = vunpack.c.l.b16 %v160
  %v840 = vunpack.c.h.b16 %v160
  %v841 = vunpack.c.l.b16 %v161
  %v842 = vunpack.c.h.b16 %v161
  %v843 = vunpack.c.l.b16 %v162
  %v844 = vunpack.c.h.b16 %v162
  %v845 = vunpack.c.l.b16 %v163
  %v846 = vunpack.c.h.b16 %v163
  %v847 = vunpack.c.l.b16 %v164
  %v848 = vunpack.c.h.b16 %v164
  %v849 = vunpack.c.l.b16 %v165
  %v850 = vunpack.c.h.b16 %v165
  %v851 = vunpack.c.l.b16 %v166
  %v852 = vunpack.c.h.b16 %v166
  %v853 = vunpack.c.l.b16 %v167
  %v854 = vunpack.c.h.b16 %v167
  %v855 = vunpack.c.l.b16 %v168
  %v856 = vunpack.c.h.b16 %v168
  %v857 = vunpack.c.l.b16 %v169
  %v858 = vunpack.c.h.b16 %v169
  %v859 = vunpack.c.l.b16 %v170
  %v860 = vunpack.c.h.b16 %v170
  %v861 = vunpack.c.l.b16 %v171
  %v862 = vunpack.c.h.b16 %v171
  %v863 = vunpack.c.l.b16 %v172
  %v864 = vunpack.c.h.b16 %v172
  %v865 = vunpack.c.l.b16 %v173
  %v866 = vunpack.c.h.b16 %v173
  %v867 = vunpack.c.l.b16 %v174
  %v868 = vunpack.c.h.b16 %v174
  %v869 = vunpack.c.l.b16 %v175
  %v870 = vunpack.c.h.b16 %v175
  %v871 = vunpack.c.l.b16 %v176
  %v872 = vunpack.c.h.b16 %v176
  %v873 = vunpack.c.l.b16 %v177
  %v874 = vunpack.c.h.b16 %v177
  %v875 = vunpack.c.l.b16 %v178
  %v876 = vunpack.c.h.b16 %v178
  %v877 = vunpack.c.l.b16 %v179
  %v878 = vunpack.c.h.b16 %v179
  %v879 = vunpack.c.l.b16 %v180
  %v880 = vunpack.c.h.b16 %v180
  %v881 = vunpack.c.l.b16 %v181
  %v882 = vunpack.c.h.b16 %v181
  %v883 = vunpack.c.l.b16 %v182
  %v884 = vunpack.c.h.b16 %v182
  %v885 = vunpack.c.l.b16 %v183
  %v886 = vunpack.c.h.b16 %v183
  %v887 = vunpack.c.l.b16 %v184
  %v888 = vunpack.c.h.b16 %v184
  %v889 = vunpack.c.l.b16 %v185
  %v890 = vunpack.c.h.b16 %v185
  %v891 = vunpack.c.l.b16 %v186
  %v892 = vunpack.c.h.b16 %v186
  %v893 = vunpack.c.l.b16 %v187
  %v894 = vunpack.c.h.b16 %v187
  %v895 = vunpack.c.l.b16 %v188
  %v896 = vunpack.c.h.b16 %v188
  %v897 = vunpack.c.l.b16 %v189
  %v898 = vunpack.c.h.b16 %v189
  %v899 = vunpack.c.l.b16 %v190
  %v900 = vunpack.c.h.b16 %v190
  %v901 = vunpack.c.l.b16 %v191
  %v902 = vunpack.c.h.b16 %v191
  %v903 = vunpack.c.l.b16 %v192
  %v904 = vunpack.c.h.b16 %v192
  %v905 = vunpack.c.l.b16 %v193
  %v906 = vunpack.c.h.b16 %v193
  %v907 = vunpack.c.l.b16 %v194
  %v908 = vunpack.c.h.b16 %v194
  %v909 = vunpack.c.l.b16 %v195
  %v910 = vunpack.c.h.b16 %v195
  %v911 = vunpack.c.l.b16 %v196
  %v912 = vunpack.c.h.b16 %v196
  %v913 = vunpack.c.l.b16 %v197
  %v914 = vunpack.c.h.b16 %v197
  %v915 = vunpack.c.l.b16 %v198
  %v916 = vunpack.c.h.b16 %v198
  %v917 = vunpack.c.l.b16 %v199
  %v918 = vunpack.c.h.b16 %v199
  %v919 = vunpack.c.l.b16 %v200
  %v920 = vunpack.c.h.b16 %v200
  %v921 = vunpack.c.l.b16 %v201
  %v922 = vunpack.c.h.b16 %v201
  %v923 = vunpack.c.l.b16 %v202
  %v924 = vunpack.c.h.b16 %v202
  %v925 = vunpack.c.l.b16 %v203
  %v926 = vunpack.c.h.b16 %v203
  %v927 = vunpack.c.l.b16 %v204
  %v928 = vunpack.c.h.b16 %v204
  %v929 = vunpack.c.l.b16 %v205
  %v930 = vunpack.c.h.b16 %v205
  %v931 = vunpack.c.l.b16 %v206
  %v932 = vunpack.c.h.b16 %v206
  %v933 = vunpack.c.l.b16 %v207
  %v934 = vunpack.c.h.b16 %v207
  %v935 = vunpack.c.l.b16 %v208
  %v936 = vunpack.c.h.b16 %v208
  %v937 = vunpack.c.l.b16 %v209
  %v938 = vunpack.c.h.b16 %v209
  %v939 = vunpack.c.l.b16 %v210
  %v940 = vunpack.c.h.b16 %v210
  %v941 = vunpack.c.l.b16 %v211
  %v942 = vunpack.c.h.b16 %v211
  %v943 = vunpack.c.l.b16 %v212
  %v944 = vunpack.c.h.b16 %v212
  %v945 = vunpack.c.l.b16 %v213
  %v946 = vunpack.c.h.b16 %v213
  %v947 = vunpack.c.l.b16 %v214
  %v948 = vunpack.c.h.b16 %v214
  %v949 = vunpack.c.l.b16 %v215
  %v950 = vunpack.c.h.b16 %v215
  %v951 = vunpack.c.l.b16 %v216
  %v952 = vunpack.c.h.b16 %v216
  %v953 = vunpack.c.l.b16 %v217
  %v954 = vunpack.c.h.b16 %v217
  %v955 = vunpack.c.l.b16 %v218
  %v956 = vunpack.c.h.b16 %v218
  %v957 = vunpack.c.l.b16 %v219
  %v958 = vunpack.c.h.b16 %v219
  %v959 = vunpack.c.l.b16 %v220
  %v960 = vunpack.c.h.b16 %v220
  %v961 = vunpack.c.l.b16 %v221
  %v962 = vunpack.c.h.b16 %v221
  %v963 = vunpack.c.l.b16 %v222
  %v964 = vunpack.c.h.b16 %v222
  %v965 = vunpack.c.l.b16 %v223
  %v966 = vunpack.c.h.b16 %v223
  %v967 = vunpack.c.l.b16 %v224
  %v968 = vunpack.c.h.b16 %v224
  %v969 = vunpack.c.l.b16 %v225
  %v970 = vunpack.c.h.b16 %v225
  %v971 = vunpack.c.l.b16 %v226
  %v972 = vunpack.c.h.b16 %v226
  %v973 = vunpack.c.l.b16 %v227
  %v974 = vunpack.c.h.b16 %v227
  %v975 = vunpack.c.l.b16 %v228
  %v976 = vunpack.c.h.b16 %v228
  %v977 = vunpack.c.l.b16 %v229
  %v978 = vunpack.c.h.b16 %v229
  %v979 = vunpack.c.l.b16 %v230
  %v980 = vunpack.c.h.b16 %v230
  %v981 = vunpack.c.l.b16 %v231
  %v982 = vunpack.c.h.b16 %v231
  %v983 = vunpack.c.l.b16 %v232
  %v984 = vunpack.c.h.b16 %v232
  %v985 = vunpack.c.l.b16 %v233
  %v986 = vunpack.c.h.b16 %v233
  %v987 = vunpack.c.l.b16 %v234
  %v988 = vunpack.c.h.b16 %v234
  %v989 = vunpack.c.l.b16 %v235
  %v990 = vunpack.c.h.b16 %v235
  %v991 = vunpack.c.l.b16 %v236
  %v992 = vunpack.c.h.b16 %v236
  %v993 = vunpack.c.l.b16 %v237
  %v994 = vunpack.c.h.b16 %v237
  %v995 = vunpack.c.l.b16 %v238
  %v996 = vunpack.c.h.b16 %v238
  %v997 = vunpack.c.l.b16 %v239
  %v998 = vunpack.c.h.b16 %v239
  %v999 = vunpack.c.l.b16 %v240
  %v1000 = vunpack.c.h.b16 %v240
  %v1001 = vunpack.c.l.b16 %v241
  %v1002 = vunpack.c.h.b16 %v241
  %v1003 = vunpack.c.l.b16 %v242
  %v1004 = vunpack.c.h.b16 %v242
  %v1005 = vunpack.c.l.b16 %v243
  %v1006 = vunpack.c.h.b16 %v243
  %v1007 = vunpack.c.l.b16 %v244
  %v1008 = vunpack.c.h.b16 %v244
  %v1009 = vunpack.c.l.b16 %v245
  %v1010 = vunpack.c.h.b16 %v245
  %v1011 = vunpack.c.l.b16 %v246
  %v1012 = vunpack.c.h.b16 %v246
  %v1013 = vunpack.c.l.b16 %v247
  %v1014 = vunpack.c.h.b16 %v247
  %v1015 = vunpack.c.l.b16 %v248
  %v1016 = vunpack.c.h.b16 %v248
  %v1017 = vunpack.c.l.b16 %v249
  %v1018 = vunpack.c.h.b16 %v249
  %v1019 = vunpack.c.l.b16 %v250
  %v1020 = vunpack.c.h.b16 %v250
  %v1021 = vunpack.c.l.b16 %v251
  %v1022 = vunpack.c.h.b16 %v251
  %v1023 = vunpack.c.l.b16 %v252
  %v1024 = vunpack.c.h.b16 %v252
  %v1025 = vunpack.c.l.b16 %v253
  %v1026 = vunpack.c.h.b16 %v253
  %v1027 = vunpack.c.l.b16 %v254
  %v1028 = vunpack.c.h.b16 %v254
  %v1029 = vunpack.c.l.b16 %v255
  %v1030 = vunpack.c.h.b16 %v255
  %v1031 = vunpack.c.l.b16 %v256
  %v1032 = vunpack.c.h.b16 %v256
  %v1033 = vunpack.c.l.b16 %v257
  %v1034 = vunpack.c.h.b16 %v257
  %v1035 = vunpack.c.l.b16 %v258
  %v1036 = vunpack.c.h.b16 %v258
  %v1037 = vunpack.c.l.b16 %v259
  %v1038 = vunpack.c.h.b16 %v259
  %v1039 = vunpack.c.l.b16 %v260
  %v1040 = vunpack.c.h.b16 %v260
  %v1041 = vunpack.c.l.b16 %v261
  %v1042 = vunpack.c.h.b16 %v261
  %v1043 = vunpack.c.l.b16 %v262
  %v1044 = vunpack.c.h.b16 %v262
  %v1045 = vunpack.c.l.b16 %v263
  %v1046 = vunpack.c.h.b16 %v263
  %v1047 = vunpack.c.l.b16 %v264
  %v1048 = vunpack.c.h.b16 %v264
  %v1049 = vunpack.c.l.b16 %v265
  %v1050 = vunpack.c.h.b16 %v265
  %v1051 = vunpack.c.l.b16 %v266
  %v1052 = vunpack.c.h.b16 %v266
  %v1053 = vunpack.c.l.b16 %v267
  %v1054 = vunpack.c.h.b16 %v267
  %v1055 = vunpack.c.l.b16 %v268
  %v1056 = vunpack.c.h.b16 %v268
  %v1057 = vunpack.c.l.b16 %v269
  %v1058 = vunpack.c.h.b16 %v269
  %v1059 = vunpack.c.l.b16 %v270
  %v1060 = vunpack.c.h.b16 %v270
  %v1061 = vunpack.c.l.b16 %v271
  %v1062 = vunpack.c.h.b16 %v271
  %v1063 = vunpack.c.l.b16 %v272
  %v1064 = vunpack.c.h.b16 %v272
  %v1065 = vunpack.c.l.b16 %v273
  %v1066 = vunpack.c.h.b16 %v273
  %v1067 = vunpack.c.l.b16 %v274
  %v1068 = vunpack.c.h.b16 %v274
  %v1069 = vunpack.c.l.b16 %v275
  %v1070 = vunpack.c.h.b16 %v275
  %v1071 = vunpack.c.l.b16 %v276
  %v1072 = vunpack.c.h.b16 %v276
  %v1073 = vunpack.c.l.b16 %v277
  %v1074 = vunpack.c.h.b16 %v277
  %v1075 = vunpack.c.l.b16 %v278
  %v1076 = vunpack.c.h.b16 %v278
  %v1077 = vunpack.c.l.b16 %v279
  %v1078 = vunpack.c.h.b16 %v279
  %v1079 = vunpack.c.l.b16 %v280
  %v1080 = vunpack.c.h.b16 %v280
  %v1081 = vunpack.c.l.b16 %v281
  %v1082 = vunpack.c.h.b16 %v281
  %v1083 = vunpack.c.l.b16 %v282
  %v1084 = vunpack.c.h.b16 %v282
  %v1085 = vunpack.c.l.b16 %v283
  %v1086 = vunpack.c.h.b16 %v283
  %v1087 = vunpack.c.l.b16 %v284
  %v1088 = vunpack.c.h.b16 %v284
  %v1089 = vunpack.c.l.b16 %v285
  %v1090 = vunpack.c.h.b16 %v285
  %v1091 = vunpack.c.l.b16 %v286
  %v1092 = vunpack.c.h.b16 %v286
  %v1093 = vunpack.c.l.b16 %v287
  %v1094 = vunpack.c.h.b16 %v287
  %v1095 = vunpack.c.l.b16 %v288
  %v1096 = vunpack.c.h.b16 %v288
  %v1097 = vunpack.c.l.b16 %v289
  %v1098 = vunpack.c.h.b16 %v289
  %v1099 = vunpack.c.l.b16 %v290
  %v1100 = vunpack.c.h.b16 %v290
  %v1101 = vunpack.c.l.b16 %v291
  %v1102 = vunpack.c.h.b16 %v291
  %v1103 = vunpack.c.l.b16 %v292
  %v1104 = vunpack.c.h.b16 %v292
  %v1105 = vunpack.c.l.b16 %v293
  %v1106 = vunpack.c.h.b16 %v293
  %v1107 = vunpack.c.l.b16 %v294
  %v1108 = vunpack.c.h.b16 %v294
  %v1109 = vunpack.c.l.b16 %v295
  %v1110 = vunpack.c.h.b16 %v295
  %v1111 = vunpack.c.l.b16 %v296
  %v1112 = vunpack.c.h.b16 %v296
  %v1113 = vunpack.c.l.b16 %v297
  %v1114 = vunpack.c.h.b16 %v297
  %v1115 = vunpack.c.l.b16 %v298
  %v1116 = vunpack.c.h.b16 %v298
  %v1117 = vpack.c.b16 %v609, %v605
  %v1118 = vpack.c.b16 %v610, %v606
  %v1119 = vpack.c.b16 %v611, %v607
  %v1120 = vpack.c.b16 %v612, %v608
  %v1121 = vpack.c.b16 %v617, %v613
  %v1122 = vpack.c.b16 %v618, %v614
  %v1123 = vpack.c.b16 %v619, %v615
  %v1124 = vpack.c.b16 %v620, %v616
  %v1125 = vpack.c.b16 %v625, %v621
  %v1126 = vpack.c.b16 %v626, %v622
  %v1127 = vpack.c.b16 %v627, %v623
  %v1128 = vpack.c.b16 %v628, %v624
  %v1129 = vpack.c.b16 %v633, %v629
  %v1130 = vpack.c.b16 %v634, %v630
  %v1131 = vpack.c.b16 %v635, %v631
  %v1132 = vpack.c.b16 %v636, %v632
  %v1133 = vpack.c.b16 %v641, %v637
  %v1134 = vpack.c.b16 %v642, %v638
  %v1135 = vpack.c.b16 %v643, %v639
  %v1136 = vpack.c.b16 %v644, %v640
  %v1137 = vpack.c.b16 %v649, %v645
  %v1138 = vpack.c.b16 %v650, %v646
  %v1139 = vpack.c.b16 %v651, %v647
  %v1140 = vpack.c.b16 %v652, %v648
  %v1141 = vpack.c.b16 %v657, %v653
  %v1142 = vpack.c.b16 %v658, %v654
  %v1143 = vpack.c.b16 %v659, %v655
  %v1144 = vpack.c.b16 %v660, %v656
  %v1145 = vpack.c.b16 %v665, %v661
  %v1146 = vpack.c.b16 %v666, %v662
  %v1147 = vpack.c.b16 %v667, %v663
  %v1148 = vpack.c.b16 %v668, %v664
  %v1149 = vpack.c.b16 %v673, %v669
  %v1150 = vpack.c.b16 %v674, %v670
  %v1151 = vpack.c.b16 %v675, %v671
  %v1152 = vpack.c.b16 %v676, %v672
  %v1153 = vpack.c.b16 %v681, %v677
  %v1154 = vpack.c.b16 %v682, %v678
  %v1155 = vpack.c.b16 %v683, %v679
  %v1156 = vpack.c.b16 %v684, %v680
  %v1157 = vpack.c.b16 %v689, %v685
  %v1158 = vpack.c.b16 %v690, %v686
  %v1159 = vpack.c.b16 %v691, %v687
  %v1160 = vpack.c.b16 %v692, %v688
  %v1161 = vpack.c.b16 %v697, %v693
  %v1162 = vpack.c.b16 %v698, %v694
  %v1163 = vpack.c.b16 %v699, %v695
  %v1164 = vpack.c.b16 %v700, %v696
  %v1165 = vpack.c.b16 %v705, %v701
  %v1166 = vpack.c.b16 %v706, %v702
  %v1167 = vpack.c.b16 %v707, %v703
  %v1168 = vpack.c.b16 %v708, %v704
  %v1169 = vpack.c.b16 %v713, %v709
  %v1170 = vpack.c.b16 %v714, %v710
  %v1171 = vpack.c.b16 %v715, %v711
  %v1172 = vpack.c.b16 %v716, %v712
  %v1173 = vpack.c.b16 %v721, %v717
  %v1174 = vpack.c.b16 %v722, %v718
  %v1175 = vpack.c.b16 %v723, %v719
  %v1176 = vpack.c.b16 %v724, %v720
  %v1177 = vpack.c.b16 %v729, %v725
  %v1178 = vpack.c.b16 %v730, %v726
  %v1179 = vpack.c.b16 %v731, %v727
  %v1180 = vpack.c.b16 %v732, %v728
  %v1181 = vpack.c.b16 %v737, %v733
  %v1182 = vpack.c.b16 %v738, %v734
  %v1183 = vpack.c.b16 %v739, %v735
  %v1184 = vpack.c.b16 %v740, %v736
  %v1185 = vpack.c.b16 %v745, %v741
  %v1186 = vpack.c.b16 %v746, %v742
  %v1187 = vpack.c.b16 %v747, %v743
  %v1188 = vpack.c.b16 %v748, %v744
  %v1189 = vpack.c.b16 %v753, %v749
  %v1190 = vpack.c.b16 %v754, %v750
  %v1191 = vpack.c.b16 %v755, %v751
  %v1192 = vpack.c.b16 %v756, %v752
  %v1193 = vpack.c.b16 %v761, %v757
  %v1194 = vpack.c.b16 %v762, %v758
  %v1195 = vpack.c.b16 %v763, %v759
  %v1196 = vpack.c.b16 %v764, %v760
  %v1197 = vpack.c.b16 %v769, %v765
  %v1198 = vpack.c.b16 %v770, %v766
  %v1199 = vpack.c.b16 %v771, %v767
  %v1200 = vpack.c.b16 %v772, %v768
  %v1201 = vpack.c.b16 %v777, %v773
  %v1202 = vpack.c.b16 %v778, %v774
  %v1203 = vpack.c.b16 %v779, %v775
  %v1204 = vpack.c.b16 %v780, %v776
  %v1205 = vpack.c.b16 %v785, %v781
  %v1206 = vpack.c.b16 %v786, %v782
  %v1207 = vpack.c.b16 %v787, %v783
  %v1208 = vpack.c.b16 %v788, %v784
  %v1209 = vpack.c.b16 %v793, %v789
  %v1210 = vpack.c.b16 %v794, %v790
  %v1211 = vpack.c.b16 %v795, %v791
  %v1212 = vpack.c.b16 %v796, %v792
  %v1213 = vpack.c.b16 %v801, %v797
  %v1214 = vpack.c.b16 %v802, %v798
  %v1215 = vpack.c.b16 %v803, %v799
  %v1216 = vpack.c.b16 %v804, %v800
  %v1217 = vpack.c.b16 %v809, %v805
  %v1218 = vpack.c.b16 %v810, %v806
  %v1219 = vpack.c.b16 %v811, %v807
  %v1220 = vpack.c.b16 %v812, %v808
  %v1221 = vpack.c.b16 %v817, %v813
  %v1222 = vpack.c.b16 %v818, %v814
  %v1223 = vpack.c.b16 %v819, %v815
  %v1224 = vpack.c.b16 %v820, %v816
  %v1225 = vpack.c.b16 %v825, %v821
  %v1226 = vpack.c.b16 %v826, %v822
  %v1227 = vpack.c.b16 %v827, %v823
  %v1228 = vpack.c.b16 %v828, %v824
  %v1229 = vpack.c.b16 %v833, %v829
  %v1230 = vpack.c.b16 %v834, %v830
  %v1231 = vpack.c.b16 %v835, %v831
  %v1232 = vpack.c.b16 %v836, %v832
  %v1233 = vpack.c.b16 %v841, %v837
  %v1234 = vpack.c.b16 %v842, %v838
  %v1235 = vpack.c.b16 %v843, %v839
  %v1236 = vpack.c.b16 %v844, %v840
  %v1237 = vpack.c.b16 %v849, %v845
  %v1238 = vpack.c.b16 %v850, %v846
  %v1239 = vpack.c.b16 %v851, %v847
  %v1240 = vpack.c.b16 %v852, %v848
  %v1241 = vpack.c.b16 %v857, %v853
  %v1242 = vpack.c.b16 %v858, %v854
  %v1243 = vpack.c.b16 %v859, %v855
  %v1244 = vpack.c.b16 %v860, %v856
  %v1245 = vpack.c.b16 %v865, %v861
  %v1246 = vpack.c.b16 %v866, %v862
  %v1247 = vpack.c.b16 %v867, %v863
  %v1248 = vpack.c.b16 %v868, %v864
  %v1249 = vpack.c.b16 %v873, %v869
  %v1250 = vpack.c.b16 %v874, %v870
  %v1251 = vpack.c.b16 %v875, %v871
  %v1252 = vpack.c.b16 %v876, %v872
  %v1253 = vpack.c.b16 %v881, %v877
  %v1254 = vpack.c.b16 %v882, %v878
  %v1255 = vpack.c.b16 %v883, %v879
  %v1256 = vpack.c.b16 %v884, %v880
  %v1257 = vpack.c.b16 %v889, %v885
  %v1258 = vpack.c.b16 %v890, %v886
  %v1259 = vpack.c.b16 %v891, %v887
  %v1260 = vpack.c.b16 %v892, %v888
  %v1261 = vpack.c.b16 %v897, %v893
  %v1262 = vpack.c.b16 %v898, %v894
  %v1263 = vpack.c.b16 %v899, %v895
  %v1264 = vpack.c.b16 %v900, %v896
  %v1265 = vpack.c.b16 %v905, %v901
  %v1266 = vpack.c.b16 %v906, %v902
  %v1267 = vpack.c.b16 %v907, %v903
  %v1268 = vpack.c.b16 %v908, %v904
  %v1269 = vpack.c.b16 %v913, %v909
  %v1270 = vpack.c.b16 %v914, %v910
  %v1271 = vpack.c.b16 %v915, %v911
  %v1272 = vpack.c.b16 %v916, %v912
  %v1273 = vpack.c.b16 %v921, %v917
  %v1274 = vpack.c.b16 %v922, %v918
  %v1275 = vpack.c.b16 %v923, %v919
  %v1276 = vpack.c.b16 %v924, %v920
  %v1277 = vpack.c.b16 %v929, %v925
  %v1278 = vpack.c.b16 %v930, %v926
  %v1279 = vpack.c.b16 %v931, %v927
  %v1280 = vpack.c.b16 %v932, %v928
  %v1281 = vpack.c.b16 %v937, %v933
  %v1282 = vpack.c.b16 %v938, %v934
  %v1283 = vpack.c.b16 %v939, %v935
  %v1284 = vpack.c.b16 %v940, %v936
  %v1285 = vpack.c.b16 %v945, %v941
  %v1286 = vpack.c.b16 %v946, %v942
  %v1287 = vpack.c.b16 %v947, %v943
  %v1288 = vpack.c.b16 %v948, %v944
  %v1289 = vpack.c.b16 %v953, %v949
  %v1290 = vpack.c.b16 %v954, %v950
  %v1291 = vpack.c.b16 %v955, %v951
  %v1292 = vpack.c.b16 %v956, %v952
  %v1293 = vpack.c.b16 %v961, %v957
  %v1294 = vpack.c.b16 %v962, %v958
  %v1295 = vpack.c.b16 %v963, %v959
  %v1296 = vpack.c.b16 %v964, %v960
  %v1297 = vpack.c.b16 %v969, %v965
  %v1298 = vpack.c.b16 %v970, %v966
  %v1299 = vpack.c.b16 %v971, %v967
  %v1300 = vpack.c.b16 %v972, %v968
  %v1301 = vpack.c.b16 %v977, %v973
  %v1302 = vpack.c.b16 %v978, %v974
  %v1303 = vpack.c.b16 %v979, %v975
  %v1304 = vpack.c.b16 %v980, %v976
  %v1305 = vpack.c.b16 %v985, %v981
  %v1306 = vpack.c.b16 %v986, %v982
  %v1307 = vpack.c.b16 %v987, %v983
  %v1308 = vpack.c.b16 %v988, %v984
  %v1309 = vpack.c.b16 %v993, %v989
  %v1310 = vpack.c.b16 %v994, %v990
  %v1311 = vpack.c.b16 %v995, %v991
  %v1312 = vpack.c.b16 %v996, %v992
  %v1313 = vpack.c.b16 %v1001, %v997
  %v1314 = vpack.c.b16 %v1002, %v998
  %v1315 = vpack.c.b16 %v1003, %v999
  %v1316 = vpack.c.b16 %v1004, %v1000
  %v1317 = vpack.c.b16 %v1009, %v1005
  %v1318 = vpack.c.b16 %v1010, %v1006
  %v1319 = vpack.c.b16 %v1011, %v1007
  %v1320 = vpack.c.b16 %v1012, %v1008
  %v1321 = vpack.c.b16 %v1017, %v1013
  %v1322 = vpack.c.b16 %v1018, %v1014
  %v1323 = vpack.c.b16 %v1019, %v1015
  %v1324 = vpack.c.b16 %v1020, %v1016
  %v1325 = vpack.c.b16 %v1025, %v1021
  %v1326 = vpack.c.b16 %v1026, %v1022
  %v1327 = vpack.c.b16 %v1027, %v1023
  %v1328 = vpack.c.b16 %v1028, %v1024
  %v1329 = vpack.c.b16 %v1033, %v1029
  %v1330 = vpack.c.b16 %v1034, %v1030
  %v1331 = vpack.c.b16 %v1035, %v1031
  %v1332 = vpack.c.b16 %v1036, %v1032
  %v1333 = vpack.c.b16 %v1041, %v1037
  %v1334 = vpack.c.b16 %v1042, %v1038
  %v1335 = vpack.c.b16 %v1043, %v1039
  %v1336 = vpack.c.b16 %v1044, %v1040
  %v1337 = vpack.c.b16 %v1049, %v1045
  %v1338 = vpack.c.b16 %v1050, %v1046
  %v1339 = vpack.c.b16 %v1051, %v1047
  %v1340 = vpack.c.b16 %v1052, %v1048
  %v1341 = vpack.c.b16 %v1057, %v1053
  %v1342 = vpack.c.b16 %v1058, %v1054
  %v1343 = vpack.c.b16 %v1059, %v1055
  %v1344 = vpack.c.b16 %v1060, %v1056
  %v1345 = vpack.c.b16 %v1065, %v1061
  %v1346 = vpack.c.b16 %v1066, %v1062
  %v1347 = vpack.c.b16 %v1067, %v1063
  %v1348 = vpack.c.b16 %v1068, %v1064
  %v1349 = vpack.c.b16 %v1073, %v1069
  %v1350 = vpack.c.b16 %v1074, %v1070
  %v1351 = vpack.c.b16 %v1075, %v1071
  %v1352 = vpack.c.b16 %v1076, %v1072
  %v1353 = vpack.c.b16 %v1081, %v1077
  %v1354 = vpack.c.b16 %v1082, %v1078
  %v1355 = vpack.c.b16 %v1083, %v1079
  %v1356 = vpack.c.b16 %v1084, %v1080
  %v1357 = vpack.c.b16 %v1089, %v1085
  %v1358 = vpack.c.b16 %v1090, %v1086
  %v1359 = vpack.c.b16 %v1091, %v1087
  %v1360 = vpack.c.b16 %v1092, %v1088
  %v1361 = vpack.c.b16 %v1097, %v1093
  %v1362 = vpack.c.b16 %v1098, %v1094
  %v1363 = vpack.c.b16 %v1099, %v1095
  %v1364 = vpack.c.b16 %v1100, %v1096
  %v1365 = vpack.c.b16 %v1105, %v1101
  %v1366 = vpack.c.b16 %v1106, %v1102
  %v1367 = vpack.c.b16 %v1107, %v1103
  %v1368 = vpack.c.b16 %v1108, %v1104
  %v1369 = vpack.c.b16 %v1113, %v1109
  %v1370 = vpack.c.b16 %v1114, %v1110
  %v1371 = vpack.c.b16 %v1115, %v1111
  %v1372 = vpack.c.b16 %v1116, %v1112
  %1629 = vmatprep.subr.bf16.mxu0 %v1118
  %1630 = vmatpush1.bf16.msra.mxu0 %v1117
  %1631 = vmatprep.subr.bf16.mxu0 %v1122
  %1632 = vmatpush1.bf16.msra.mxu0 %v1121
  %1633 = vmatprep.subr.bf16.mxu0 %v1126
  %1634 = vmatpush1.bf16.msra.mxu0 %v1125
  %1635 = vmatprep.subr.bf16.mxu0 %v1130
  %1636 = vmatpush1.bf16.msra.mxu0 %v1129
  %1637 = vmatprep.subr.bf16.mxu0 %v1134
  %1638 = vmatpush1.bf16.msra.mxu0 %v1133
  %1639 = vmatprep.subr.bf16.mxu0 %v1138
  %1640 = vmatpush1.bf16.msra.mxu0 %v1137
  %1641 = vmatprep.subr.bf16.mxu0 %v1142
  %1642 = vmatpush1.bf16.msra.mxu0 %v1141
  %1643 = vmatprep.subr.bf16.mxu0 %v1146
  %1644 = vmatpush1.bf16.msra.mxu0 %v1145
  %1645 = vmatprep.subr.bf16.mxu0 %v1150
  %1646 = vmatpush1.bf16.msra.mxu0 %v1149
  %1647 = vmatprep.subr.bf16.mxu0 %v1154
  %1648 = vmatpush1.bf16.msra.mxu0 %v1153
  %1649 = vmatprep.subr.bf16.mxu0 %v1158
  %1650 = vmatpush1.bf16.msra.mxu0 %v1157
  %1651 = vmatprep.subr.bf16.mxu0 %v1162
  %1652 = vmatpush1.bf16.msra.mxu0 %v1161
  %1653 = vmatprep.subr.bf16.mxu0 %v1166
  %1654 = vmatpush1.bf16.msra.mxu0 %v1165
  %1655 = vmatprep.subr.bf16.mxu0 %v1170
  %1656 = vmatpush1.bf16.msra.mxu0 %v1169
  %1657 = vmatprep.subr.bf16.mxu0 %v1174
  %1658 = vmatpush1.bf16.msra.mxu0 %v1173
  %1659 = vmatprep.subr.bf16.mxu0 %v1178
  %1660 = vmatpush1.bf16.msra.mxu0 %v1177
  %1661 = vmatprep.mubr.bf16.mxu0 %v334
  %1662 = vmatmul.mubr.bf16.gmra.mrb[0].mxu0 %v333
  %v1663 = vpop.f32.mrb[0].mxu0
  %v1664 = vadd.f32 %v304, %v1663
  %v1665 = vpop.f32.mrb[0].mxu0
  %v1666 = vadd.f32 %v308, %v1665
  %v1667 = vpop.f32.mrb[0].mxu0
  %v1668 = vpop.f32.mrb[0].mxu0
  %1669 = vdwg.mxu0
  %1670 = vmatprep.subr.bf16.mxu0 %v1182
  %1671 = vmatpush1.bf16.msra.mxu0 %v1181
  %1672 = vmatprep.subr.bf16.mxu0 %v1186
  %1673 = vmatpush1.bf16.msra.mxu0 %v1185
  %1674 = vmatprep.subr.bf16.mxu0 %v1190
  %1675 = vmatpush1.bf16.msra.mxu0 %v1189
  %1676 = vmatprep.subr.bf16.mxu0 %v1194
  %1677 = vmatpush1.bf16.msra.mxu0 %v1193
  %1678 = vmatprep.subr.bf16.mxu0 %v1198
  %1679 = vmatpush1.bf16.msra.mxu0 %v1197
  %1680 = vmatprep.subr.bf16.mxu0 %v1202
  %1681 = vmatpush1.bf16.msra.mxu0 %v1201
  %1682 = vmatprep.subr.bf16.mxu0 %v1206
  %1683 = vmatpush1.bf16.msra.mxu0 %v1205
  %1684 = vmatprep.subr.bf16.mxu0 %v1210
  %1685 = vmatpush1.bf16.msra.mxu0 %v1209
  %1686 = vmatprep.subr.bf16.mxu0 %v1214
  %1687 = vmatpush1.bf16.msra.mxu0 %v1213
  %1688 = vmatprep.subr.bf16.mxu0 %v1218
  %1689 = vmatpush1.bf16.msra.mxu0 %v1217
  %1690 = vmatprep.subr.bf16.mxu0 %v1222
  %1691 = vmatpush1.bf16.msra.mxu0 %v1221
  %1692 = vmatprep.subr.bf16.mxu0 %v1226
  %1693 = vmatpush1.bf16.msra.mxu0 %v1225
  %1694 = vmatprep.subr.bf16.mxu0 %v1230
  %1695 = vmatpush1.bf16.msra.mxu0 %v1229
  %1696 = vmatprep.subr.bf16.mxu0 %v1234
  %1697 = vmatpush1.bf16.msra.mxu0 %v1233
  %1698 = vmatprep.subr.bf16.mxu0 %v1238
  %1699 = vmatpush1.bf16.msra.mxu0 %v1237
  %1700 = vmatprep.subr.bf16.mxu0 %v1242
  %1701 = vmatpush1.bf16.msra.mxu0 %v1241
  %1702 = vmatprep.mubr.bf16.mxu0 %v336
  %1703 = vmatmul.mubr.bf16.gmra.mrb[0].mxu0 %v335
  %v1704 = vpop.f32.mrb[0].mxu0
  %v1705 = vadd.f32 %v1664, %v1704
  %v1706 = vpop.f32.mrb[0].mxu0
  %v1707 = vadd.f32 %v1666, %v1706
  %v1708 = vpop.f32.mrb[0].mxu0
  %v1709 = vpop.f32.mrb[0].mxu0
  %1710 = vdwg.mxu0
  %1711 = vmatprep.subr.bf16.mxu0 %v1246
  %1712 = vmatpush1.bf16.msra.mxu0 %v1245
  %1713 = vmatprep.subr.bf16.mxu0 %v1250
  %1714 = vmatpush1.bf16.msra.mxu0 %v1249
  %1715 = vmatprep.subr.bf16.mxu0 %v1254
  %1716 = vmatpush1.bf16.msra.mxu0 %v1253
  %1717 = vmatprep.subr.bf16.mxu0 %v1258
  %1718 = vmatpush1.bf16.msra.mxu0 %v1257
  %1719 = vmatprep.subr.bf16.mxu0 %v1262
  %1720 = vmatpush1.bf16.msra.mxu0 %v1261
  %1721 = vmatprep.subr.bf16.mxu0 %v1266
  %1722 = vmatpush1.bf16.msra.mxu0 %v1265
  %1723 = vmatprep.subr.bf16.mxu0 %v1270
  %1724 = vmatpush1.bf16.msra.mxu0 %v1269
  %1725 = vmatprep.subr.bf16.mxu0 %v1274
  %1726 = vmatpush1.bf16.msra.mxu0 %v1273
  %1727 = vmatprep.subr.bf16.mxu0 %v1278
  %1728 = vmatpush1.bf16.msra.mxu0 %v1277
  %1729 = vmatprep.subr.bf16.mxu0 %v1282
  %1730 = vmatpush1.bf16.msra.mxu0 %v1281
  %1731 = vmatprep.subr.bf16.mxu0 %v1286
  %1732 = vmatpush1.bf16.msra.mxu0 %v1285
  %1733 = vmatprep.subr.bf16.mxu0 %v1290
  %1734 = vmatpush1.bf16.msra.mxu0 %v1289
  %1735 = vmatprep.subr.bf16.mxu0 %v1294
  %1736 = vmatpush1.bf16.msra.mxu0 %v1293
  %1737 = vmatprep.subr.bf16.mxu0 %v1298
  %1738 = vmatpush1.bf16.msra.mxu0 %v1297
  %1739 = vmatprep.subr.bf16.mxu0 %v1302
  %1740 = vmatpush1.bf16.msra.mxu0 %v1301
  %1741 = vmatprep.subr.bf16.mxu0 %v1306
  %1742 = vmatpush1.bf16.msra.mxu0 %v1305
  %1743 = vmatprep.mubr.bf16.mxu0 %v338
  %1744 = vmatmul.mubr.bf16.gmra.mrb[0].mxu0 %v337
  %v1745 = vpop.f32.mrb[0].mxu0
  %v1746 = vadd.f32 %v1705, %v1745
  %v1747 = vpop.f32.mrb[0].mxu0
  %v1748 = vadd.f32 %v1707, %v1747
  %v1749 = vpop.f32.mrb[0].mxu0
  %v1750 = vpop.f32.mrb[0].mxu0
  %1751 = vdwg.mxu0
  %1752 = vmatprep.subr.bf16.mxu0 %v1310
  %1753 = vmatpush1.bf16.msra.mxu0 %v1309
  %1754 = vmatprep.subr.bf16.mxu0 %v1314
  %1755 = vmatpush1.bf16.msra.mxu0 %v1313
  %1756 = vmatprep.subr.bf16.mxu0 %v1318
  %1757 = vmatpush1.bf16.msra.mxu0 %v1317
  %1758 = vmatprep.subr.bf16.mxu0 %v1322
  %1759 = vmatpush1.bf16.msra.mxu0 %v1321
  %1760 = vmatprep.subr.bf16.mxu0 %v1326
  %1761 = vmatpush1.bf16.msra.mxu0 %v1325
  %1762 = vmatprep.subr.bf16.mxu0 %v1330
  %1763 = vmatpush1.bf16.msra.mxu0 %v1329
  %1764 = vmatprep.subr.bf16.mxu0 %v1334
  %1765 = vmatpush1.bf16.msra.mxu0 %v1333
  %1766 = vmatprep.subr.bf16.mxu0 %v1338
  %1767 = vmatpush1.bf16.msra.mxu0 %v1337
  %1768 = vmatprep.subr.bf16.mxu0 %v1342
  %1769 = vmatpush1.bf16.msra.mxu0 %v1341
  %1770 = vmatprep.subr.bf16.mxu0 %v1346
  %1771 = vmatpush1.bf16.msra.mxu0 %v1345
  %1772 = vmatprep.subr.bf16.mxu0 %v1350
  %1773 = vmatpush1.bf16.msra.mxu0 %v1349
  %1774 = vmatprep.subr.bf16.mxu0 %v1354
  %1775 = vmatpush1.bf16.msra.mxu0 %v1353
  %1776 = vmatprep.subr.bf16.mxu0 %v1358
  %1777 = vmatpush1.bf16.msra.mxu0 %v1357
  %1778 = vmatprep.subr.bf16.mxu0 %v1362
  %1779 = vmatpush1.bf16.msra.mxu0 %v1361
  %1780 = vmatprep.subr.bf16.mxu0 %v1366
  %1781 = vmatpush1.bf16.msra.mxu0 %v1365
  %1782 = vmatprep.subr.bf16.mxu0 %v1370
  %1783 = vmatpush1.bf16.msra.mxu0 %v1369
  %1784 = vmatprep.mubr.bf16.mxu0 %v340
  %1785 = vmatmul.mubr.bf16.gmra.mrb[0].mxu0 %v339
  %v1786 = vpop.f32.mrb[0].mxu0
  %v1787 = vadd.f32 %v1746, %v1786
  %v1788 = vpop.f32.mrb[0].mxu0
  %v1789 = vadd.f32 %v1748, %v1788
  %v1790 = vpop.f32.mrb[0].mxu0
  %v1791 = vpop.f32.mrb[0].mxu0
  %1792 = vdwg.mxu0
  %1793 = vmatprep.subr.bf16.mxu0 %v1120
  %1794 = vmatpush1.bf16.msra.mxu0 %v1119
  %1795 = vmatprep.subr.bf16.mxu0 %v1124
  %1796 = vmatpush1.bf16.msra.mxu0 %v1123
  %1797 = vmatprep.subr.bf16.mxu0 %v1128
  %1798 = vmatpush1.bf16.msra.mxu0 %v1127
  %1799 = vmatprep.subr.bf16.mxu0 %v1132
  %1800 = vmatpush1.bf16.msra.mxu0 %v1131
  %1801 = vmatprep.subr.bf16.mxu0 %v1136
  %1802 = vmatpush1.bf16.msra.mxu0 %v1135
  %1803 = vmatprep.subr.bf16.mxu0 %v1140
  %1804 = vmatpush1.bf16.msra.mxu0 %v1139
  %1805 = vmatprep.subr.bf16.mxu0 %v1144
  %1806 = vmatpush1.bf16.msra.mxu0 %v1143
  %1807 = vmatprep.subr.bf16.mxu0 %v1148
  %1808 = vmatpush1.bf16.msra.mxu0 %v1147
  %1809 = vmatprep.subr.bf16.mxu0 %v1152
  %1810 = vmatpush1.bf16.msra.mxu0 %v1151
  %1811 = vmatprep.subr.bf16.mxu0 %v1156
  %1812 = vmatpush1.bf16.msra.mxu0 %v1155
  %1813 = vmatprep.subr.bf16.mxu0 %v1160
  %1814 = vmatpush1.bf16.msra.mxu0 %v1159
  %1815 = vmatprep.subr.bf16.mxu0 %v1164
  %1816 = vmatpush1.bf16.msra.mxu0 %v1163
  %1817 = vmatprep.subr.bf16.mxu0 %v1168
  %1818 = vmatpush1.bf16.msra.mxu0 %v1167
  %1819 = vmatprep.subr.bf16.mxu0 %v1172
  %1820 = vmatpush1.bf16.msra.mxu0 %v1171
  %1821 = vmatprep.subr.bf16.mxu0 %v1176
  %1822 = vmatpush1.bf16.msra.mxu0 %v1175
  %1823 = vmatprep.subr.bf16.mxu0 %v1180
  %1824 = vmatpush1.bf16.msra.mxu0 %v1179
  %1825 = vmatprep.mubr.bf16.mxu0 %v334
  %1826 = vmatmul.mubr.bf16.gmra.mrb[0].mxu0 %v333
  %v1827 = vpop.f32.mrb[0].mxu0
  %v1828 = vadd.f32 %v312, %v1827
  %v1829 = vpop.f32.mrb[0].mxu0
  %v1830 = vadd.f32 %v316, %v1829
  %v1831 = vpop.f32.mrb[0].mxu0
  %v1832 = vpop.f32.mrb[0].mxu0
  %1833 = vdwg.mxu0
  %1834 = vmatprep.subr.bf16.mxu0 %v1184
  %1835 = vmatpush1.bf16.msra.mxu0 %v1183
  %1836 = vmatprep.subr.bf16.mxu0 %v1188
  %1837 = vmatpush1.bf16.msra.mxu0 %v1187
  %1838 = vmatprep.subr.bf16.mxu0 %v1192
  %1839 = vmatpush1.bf16.msra.mxu0 %v1191
  %1840 = vmatprep.subr.bf16.mxu0 %v1196
  %1841 = vmatpush1.bf16.msra.mxu0 %v1195
  %1842 = vmatprep.subr.bf16.mxu0 %v1200
  %1843 = vmatpush1.bf16.msra.mxu0 %v1199
  %1844 = vmatprep.subr.bf16.mxu0 %v1204
  %1845 = vmatpush1.bf16.msra.mxu0 %v1203
  %1846 = vmatprep.subr.bf16.mxu0 %v1208
  %1847 = vmatpush1.bf16.msra.mxu0 %v1207
  %1848 = vmatprep.subr.bf16.mxu0 %v1212
  %1849 = vmatpush1.bf16.msra.mxu0 %v1211
  %1850 = vmatprep.subr.bf16.mxu0 %v1216
  %1851 = vmatpush1.bf16.msra.mxu0 %v1215
  %1852 = vmatprep.subr.bf16.mxu0 %v1220
  %1853 = vmatpush1.bf16.msra.mxu0 %v1219
  %1854 = vmatprep.subr.bf16.mxu0 %v1224
  %1855 = vmatpush1.bf16.msra.mxu0 %v1223
  %1856 = vmatprep.subr.bf16.mxu0 %v1228
  %1857 = vmatpush1.bf16.msra.mxu0 %v1227
  %1858 = vmatprep.subr.bf16.mxu0 %v1232
  %1859 = vmatpush1.bf16.msra.mxu0 %v1231
  %1860 = vmatprep.subr.bf16.mxu0 %v1236
  %1861 = vmatpush1.bf16.msra.mxu0 %v1235
  %1862 = vmatprep.subr.bf16.mxu0 %v1240
  %1863 = vmatpush1.bf16.msra.mxu0 %v1239
  %1864 = vmatprep.subr.bf16.mxu0 %v1244
  %1865 = vmatpush1.bf16.msra.mxu0 %v1243
  %1866 = vmatprep.mubr.bf16.mxu0 %v336
  %1867 = vmatmul.mubr.bf16.gmra.mrb[0].mxu0 %v335
  %v1868 = vpop.f32.mrb[0].mxu0
  %v1869 = vadd.f32 %v1828, %v1868
  %v1870 = vpop.f32.mrb[0].mxu0
  %v1871 = vadd.f32 %v1830, %v1870
  %v1872 = vpop.f32.mrb[0].mxu0
  %v1873 = vpop.f32.mrb[0].mxu0
  %1874 = vdwg.mxu0
  %1875 = vmatprep.subr.bf16.mxu0 %v1248
  %1876 = vmatpush1.bf16.msra.mxu0 %v1247
  %1877 = vmatprep.subr.bf16.mxu0 %v1252
  %1878 = vmatpush1.bf16.msra.mxu0 %v1251
  %1879 = vmatprep.subr.bf16.mxu0 %v1256
  %1880 = vmatpush1.bf16.msra.mxu0 %v1255
  %1881 = vmatprep.subr.bf16.mxu0 %v1260
  %1882 = vmatpush1.bf16.msra.mxu0 %v1259
  %1883 = vmatprep.subr.bf16.mxu0 %v1264
  %1884 = vmatpush1.bf16.msra.mxu0 %v1263
  %1885 = vmatprep.subr.bf16.mxu0 %v1268
  %1886 = vmatpush1.bf16.msra.mxu0 %v1267
  %1887 = vmatprep.subr.bf16.mxu0 %v1272
  %1888 = vmatpush1.bf16.msra.mxu0 %v1271
  %1889 = vmatprep.subr.bf16.mxu0 %v1276
  %1890 = vmatpush1.bf16.msra.mxu0 %v1275
  %1891 = vmatprep.subr.bf16.mxu0 %v1280
  %1892 = vmatpush1.bf16.msra.mxu0 %v1279
  %1893 = vmatprep.subr.bf16.mxu0 %v1284
  %1894 = vmatpush1.bf16.msra.mxu0 %v1283
  %1895 = vmatprep.subr.bf16.mxu0 %v1288
  %1896 = vmatpush1.bf16.msra.mxu0 %v1287
  %1897 = vmatprep.subr.bf16.mxu0 %v1292
  %1898 = vmatpush1.bf16.msra.mxu0 %v1291
  %1899 = vmatprep.subr.bf16.mxu0 %v1296
  %1900 = vmatpush1.bf16.msra.mxu0 %v1295
  %1901 = vmatprep.subr.bf16.mxu0 %v1300
  %1902 = vmatpush1.bf16.msra.mxu0 %v1299
  %1903 = vmatprep.subr.bf16.mxu0 %v1304
  %1904 = vmatpush1.bf16.msra.mxu0 %v1303
  %1905 = vmatprep.subr.bf16.mxu0 %v1308
  %1906 = vmatpush1.bf16.msra.mxu0 %v1307
  %1907 = vmatprep.mubr.bf16.mxu0 %v338
  %1908 = vmatmul.mubr.bf16.gmra.mrb[0].mxu0 %v337
  %v1909 = vpop.f32.mrb[0].mxu0
  %v1910 = vadd.f32 %v1869, %v1909
  %v1911 = vpop.f32.mrb[0].mxu0
  %v1912 = vadd.f32 %v1871, %v1911
  %v1913 = vpop.f32.mrb[0].mxu0
  %v1914 = vpop.f32.mrb[0].mxu0
  %1915 = vdwg.mxu0
  %1916 = vmatprep.subr.bf16.mxu0 %v1312
  %1917 = vmatpush1.bf16.msra.mxu0 %v1311
  %1918 = vmatprep.subr.bf16.mxu0 %v1316
  %1919 = vmatpush1.bf16.msra.mxu0 %v1315
  %1920 = vmatprep.subr.bf16.mxu0 %v1320
  %1921 = vmatpush1.bf16.msra.mxu0 %v1319
  %1922 = vmatprep.subr.bf16.mxu0 %v1324
  %1923 = vmatpush1.bf16.msra.mxu0 %v1323
  %1924 = vmatprep.subr.bf16.mxu0 %v1328
  %1925 = vmatpush1.bf16.msra.mxu0 %v1327
  %1926 = vmatprep.subr.bf16.mxu0 %v1332
  %1927 = vmatpush1.bf16.msra.mxu0 %v1331
  %1928 = vmatprep.subr.bf16.mxu0 %v1336
  %1929 = vmatpush1.bf16.msra.mxu0 %v1335
  %1930 = vmatprep.subr.bf16.mxu0 %v1340
  %1931 = vmatpush1.bf16.msra.mxu0 %v1339
  %1932 = vmatprep.subr.bf16.mxu0 %v1344
  %1933 = vmatpush1.bf16.msra.mxu0 %v1343
  %1934 = vmatprep.subr.bf16.mxu0 %v1348
  %1935 = vmatpush1.bf16.msra.mxu0 %v1347
  %1936 = vmatprep.subr.bf16.mxu0 %v1352
  %1937 = vmatpush1.bf16.msra.mxu0 %v1351
  %1938 = vmatprep.subr.bf16.mxu0 %v1356
  %1939 = vmatpush1.bf16.msra.mxu0 %v1355
  %1940 = vmatprep.subr.bf16.mxu0 %v1360
  %1941 = vmatpush1.bf16.msra.mxu0 %v1359
  %1942 = vmatprep.subr.bf16.mxu0 %v1364
  %1943 = vmatpush1.bf16.msra.mxu0 %v1363
  %1944 = vmatprep.subr.bf16.mxu0 %v1368
  %1945 = vmatpush1.bf16.msra.mxu0 %v1367
  %1946 = vmatprep.subr.bf16.mxu0 %v1372
  %1947 = vmatpush1.bf16.msra.mxu0 %v1371
  %1948 = vmatprep.mubr.bf16.mxu0 %v340
  %1949 = vmatmul.mubr.bf16.gmra.mrb[0].mxu0 %v339
  %v1950 = vpop.f32.mrb[0].mxu0
  %v1951 = vadd.f32 %v1910, %v1950
  %v1952 = vpop.f32.mrb[0].mxu0
  %v1953 = vadd.f32 %v1912, %v1952
  %v1954 = vpop.f32.mrb[0].mxu0
  %v1955 = vpop.f32.mrb[0].mxu0
  %1956 = vdwg.mxu0
  %vm1957 = vcmp.ge.f32.partialorder %v1787, 0.0
  %vm1958 = vcmp.ge.f32.partialorder %v1789, 0.0
  %vm1959 = vcmp.ge.f32.partialorder %v1951, 0.0
  %vm1960 = vcmp.ge.f32.partialorder %v1953, 0.0
  %v1961 = vmul.f32 %v1787, 0.2
  %v1962 = vmul.f32 %v1789, 0.2
  %v1963 = vmul.f32 %v1951, 0.2
  %v1964 = vmul.f32 %v1953, 0.2
  %v1965 = vsel %vm1957, %v1787, %v1961
  %v1966 = vsel %vm1958, %v1789, %v1962
  %v1967 = vsel %vm1959, %v1951, %v1963
  %v1968 = vsel %vm1960, %v1953, %v1964
  %v1969 = vpack.c.bf16 %v1965, %v1965
  %v1970 = vpack.c.bf16 %v1966, %v1966
  %v1971 = vpack.c.bf16 %v1967, %v1967
  %v1972 = vpack.c.bf16 %v1968, %v1968
  %v1973 = vld [vmem:[%s3] sm:$0xff]
  %v1974 = vld [vmem:[%s3 + $0x8] sm:$0xff]
  %v1975 = vld [vmem:[%s3 + $0x10] sm:$0xff]
  %v1976 = vld [vmem:[%s3 + $0x18] sm:$0xff]
  %v1977 = vld [vmem:[%s3 + $0x20] sm:$0xff]
  %v1978 = vld [vmem:[%s3 + $0x28] sm:$0xff]
  %v1979 = vld [vmem:[%s3 + $0x30] sm:$0xff]
  %v1980 = vld [vmem:[%s3 + $0x38] sm:$0xff]
  %v1981 = vld [vmem:[%s3 + $0x40] sm:$0xff]
  %v1982 = vld [vmem:[%s3 + $0x48] sm:$0xff]
  %v1983 = vld [vmem:[%s3 + $0x50] sm:$0xff]
  %v1984 = vld [vmem:[%s3 + $0x58] sm:$0xff]
  %v1985 = vld [vmem:[%s3 + $0x60] sm:$0xff]
  %v1986 = vld [vmem:[%s3 + $0x68] sm:$0xff]
  %v1987 = vld [vmem:[%s3 + $0x70] sm:$0xff]
  %v1988 = vld [vmem:[%s3 + $0x78] sm:$0xff]
  %v1989 = vld [vmem:[%s3 + $0x80] sm:$0xff]
  %v1990 = vld [vmem:[%s3 + $0x88] sm:$0xff]
  %v1991 = vld [vmem:[%s3 + $0x90] sm:$0xff]
  %v1992 = vld [vmem:[%s3 + $0x98] sm:$0xff]
  %v1993 = vld [vmem:[%s3 + $0xa0] sm:$0xff]
  %v1994 = vld [vmem:[%s3 + $0xa8] sm:$0xff]
  %v1995 = vld [vmem:[%s3 + $0xb0] sm:$0xff]
  %v1996 = vld [vmem:[%s3 + $0xb8] sm:$0xff]
  %v1997 = vld [vmem:[%s3 + $0xc0] sm:$0xff]
  %v1998 = vld [vmem:[%s3 + $0xc8] sm:$0xff]
  %v1999 = vld [vmem:[%s3 + $0xd0] sm:$0xff]
  %v2000 = vld [vmem:[%s3 + $0xd8] sm:$0xff]
  %v2001 = vld [vmem:[%s3 + $0xe0] sm:$0xff]
  %v2002 = vld [vmem:[%s3 + $0xe8] sm:$0xff]
  %v2003 = vld [vmem:[%s3 + $0xf0] sm:$0xff]
  %v2004 = vld [vmem:[%s3 + $0xf8] sm:$0xff]
  %v2005 = vld [vmem:[%s3 + $0x100] sm:$0xff]
  %v2006 = vld [vmem:[%s3 + $0x108] sm:$0xff]
  %v2007 = vld [vmem:[%s3 + $0x110] sm:$0xff]
  %v2008 = vld [vmem:[%s3 + $0x118] sm:$0xff]
  %v2009 = vld [vmem:[%s3 + $0x120] sm:$0xff]
  %v2010 = vld [vmem:[%s3 + $0x128] sm:$0xff]
  %v2011 = vld [vmem:[%s3 + $0x130] sm:$0xff]
  %v2012 = vld [vmem:[%s3 + $0x138] sm:$0xff]
  %v2013 = vld [vmem:[%s3 + $0x140] sm:$0xff]
  %v2014 = vld [vmem:[%s3 + $0x148] sm:$0xff]
  %v2015 = vld [vmem:[%s3 + $0x150] sm:$0xff]
  %v2016 = vld [vmem:[%s3 + $0x158] sm:$0xff]
  %v2017 = vld [vmem:[%s3 + $0x160] sm:$0xff]
  %v2018 = vld [vmem:[%s3 + $0x168] sm:$0xff]
  %v2019 = vld [vmem:[%s3 + $0x170] sm:$0xff]
  %v2020 = vld [vmem:[%s3 + $0x178] sm:$0xff]
  %v2021 = vld [vmem:[%s3 + $0x180] sm:$0xff]
  %v2022 = vld [vmem:[%s3 + $0x188] sm:$0xff]
  %v2023 = vld [vmem:[%s3 + $0x190] sm:$0xff]
  %v2024 = vld [vmem:[%s3 + $0x198] sm:$0xff]
  %v2025 = vld [vmem:[%s3 + $0x1a0] sm:$0xff]
  %v2026 = vld [vmem:[%s3 + $0x1a8] sm:$0xff]
  %v2027 = vld [vmem:[%s3 + $0x1b0] sm:$0xff]
  %v2028 = vld [vmem:[%s3 + $0x1b8] sm:$0xff]
  %v2029 = vld [vmem:[%s3 + $0x1c0] sm:$0xff]
  %v2030 = vld [vmem:[%s3 + $0x1c8] sm:$0xff]
  %v2031 = vld [vmem:[%s3 + $0x1d0] sm:$0xff]
  %v2032 = vld [vmem:[%s3 + $0x1d8] sm:$0xff]
  %v2033 = vld [vmem:[%s3 + $0x1e0] sm:$0xff]
  %v2034 = vld [vmem:[%s3 + $0x1e8] sm:$0xff]
  %v2035 = vld [vmem:[%s3 + $0x1f0] sm:$0xff]
  %v2036 = vld [vmem:[%s3 + $0x1f8] sm:$0xff]
  %v2037 = vld [vmem:[%s4] sm:$0x3]
  %v2039 = vlaneseq
  %v2040 = vshrl.u32 %v2039, 7
  %v2041 = vsub.s32 0, %v2040
  %v2042 = vrot.slane %v2037, %v2041
  %v2043 = vlaneseq
  %v2044 = vshrl.u32 %v2043, 7
  %v2045 = vsub.s32 1, %v2044
  %v2046 = vrot.slane %v2037, %v2045
  %v2113 = vunpack.c.l.b16 %v1973
  %v2114 = vunpack.c.h.b16 %v1973
  %v2115 = vunpack.c.l.b16 %v1974
  %v2116 = vunpack.c.h.b16 %v1974
  %v2117 = vunpack.c.l.b16 %v1975
  %v2118 = vunpack.c.h.b16 %v1975
  %v2119 = vunpack.c.l.b16 %v1976
  %v2120 = vunpack.c.h.b16 %v1976
  %v2121 = vunpack.c.l.b16 %v1977
  %v2122 = vunpack.c.h.b16 %v1977
  %v2123 = vunpack.c.l.b16 %v1978
  %v2124 = vunpack.c.h.b16 %v1978
  %v2125 = vunpack.c.l.b16 %v1979
  %v2126 = vunpack.c.h.b16 %v1979
  %v2127 = vunpack.c.l.b16 %v1980
  %v2128 = vunpack.c.h.b16 %v1980
  %v2129 = vunpack.c.l.b16 %v1981
  %v2130 = vunpack.c.h.b16 %v1981
  %v2131 = vunpack.c.l.b16 %v1982
  %v2132 = vunpack.c.h.b16 %v1982
  %v2133 = vunpack.c.l.b16 %v1983
  %v2134 = vunpack.c.h.b16 %v1983
  %v2135 = vunpack.c.l.b16 %v1984
  %v2136 = vunpack.c.h.b16 %v1984
  %v2137 = vunpack.c.l.b16 %v1985
  %v2138 = vunpack.c.h.b16 %v1985
  %v2139 = vunpack.c.l.b16 %v1986
  %v2140 = vunpack.c.h.b16 %v1986
  %v2141 = vunpack.c.l.b16 %v1987
  %v2142 = vunpack.c.h.b16 %v1987
  %v2143 = vunpack.c.l.b16 %v1988
  %v2144 = vunpack.c.h.b16 %v1988
  %v2145 = vunpack.c.l.b16 %v1989
  %v2146 = vunpack.c.h.b16 %v1989
  %v2147 = vunpack.c.l.b16 %v1990
  %v2148 = vunpack.c.h.b16 %v1990
  %v2149 = vunpack.c.l.b16 %v1991
  %v2150 = vunpack.c.h.b16 %v1991
  %v2151 = vunpack.c.l.b16 %v1992
  %v2152 = vunpack.c.h.b16 %v1992
  %v2153 = vunpack.c.l.b16 %v1993
  %v2154 = vunpack.c.h.b16 %v1993
  %v2155 = vunpack.c.l.b16 %v1994
  %v2156 = vunpack.c.h.b16 %v1994
  %v2157 = vunpack.c.l.b16 %v1995
  %v2158 = vunpack.c.h.b16 %v1995
  %v2159 = vunpack.c.l.b16 %v1996
  %v2160 = vunpack.c.h.b16 %v1996
  %v2161 = vunpack.c.l.b16 %v1997
  %v2162 = vunpack.c.h.b16 %v1997
  %v2163 = vunpack.c.l.b16 %v1998
  %v2164 = vunpack.c.h.b16 %v1998
  %v2165 = vunpack.c.l.b16 %v1999
  %v2166 = vunpack.c.h.b16 %v1999
  %v2167 = vunpack.c.l.b16 %v2000
  %v2168 = vunpack.c.h.b16 %v2000
  %v2169 = vunpack.c.l.b16 %v2001
  %v2170 = vunpack.c.h.b16 %v2001
  %v2171 = vunpack.c.l.b16 %v2002
  %v2172 = vunpack.c.h.b16 %v2002
  %v2173 = vunpack.c.l.b16 %v2003
  %v2174 = vunpack.c.h.b16 %v2003
  %v2175 = vunpack.c.l.b16 %v2004
  %v2176 = vunpack.c.h.b16 %v2004
  %v2177 = vunpack.c.l.b16 %v2005
  %v2178 = vunpack.c.h.b16 %v2005
  %v2179 = vunpack.c.l.b16 %v2006
  %v2180 = vunpack.c.h.b16 %v2006
  %v2181 = vunpack.c.l.b16 %v2007
  %v2182 = vunpack.c.h.b16 %v2007
  %v2183 = vunpack.c.l.b16 %v2008
  %v2184 = vunpack.c.h.b16 %v2008
  %v2185 = vunpack.c.l.b16 %v2009
  %v2186 = vunpack.c.h.b16 %v2009
  %v2187 = vunpack.c.l.b16 %v2010
  %v2188 = vunpack.c.h.b16 %v2010
  %v2189 = vunpack.c.l.b16 %v2011
  %v2190 = vunpack.c.h.b16 %v2011
  %v2191 = vunpack.c.l.b16 %v2012
  %v2192 = vunpack.c.h.b16 %v2012
  %v2193 = vunpack.c.l.b16 %v2013
  %v2194 = vunpack.c.h.b16 %v2013
  %v2195 = vunpack.c.l.b16 %v2014
  %v2196 = vunpack.c.h.b16 %v2014
  %v2197 = vunpack.c.l.b16 %v2015
  %v2198 = vunpack.c.h.b16 %v2015
  %v2199 = vunpack.c.l.b16 %v2016
  %v2200 = vunpack.c.h.b16 %v2016
  %v2201 = vunpack.c.l.b16 %v2017
  %v2202 = vunpack.c.h.b16 %v2017
  %v2203 = vunpack.c.l.b16 %v2018
  %v2204 = vunpack.c.h.b16 %v2018
  %v2205 = vunpack.c.l.b16 %v2019
  %v2206 = vunpack.c.h.b16 %v2019
  %v2207 = vunpack.c.l.b16 %v2020
  %v2208 = vunpack.c.h.b16 %v2020
  %v2209 = vunpack.c.l.b16 %v2021
  %v2210 = vunpack.c.h.b16 %v2021
  %v2211 = vunpack.c.l.b16 %v2022
  %v2212 = vunpack.c.h.b16 %v2022
  %v2213 = vunpack.c.l.b16 %v2023
  %v2214 = vunpack.c.h.b16 %v2023
  %v2215 = vunpack.c.l.b16 %v2024
  %v2216 = vunpack.c.h.b16 %v2024
  %v2217 = vunpack.c.l.b16 %v2025
  %v2218 = vunpack.c.h.b16 %v2025
  %v2219 = vunpack.c.l.b16 %v2026
  %v2220 = vunpack.c.h.b16 %v2026
  %v2221 = vunpack.c.l.b16 %v2027
  %v2222 = vunpack.c.h.b16 %v2027
  %v2223 = vunpack.c.l.b16 %v2028
  %v2224 = vunpack.c.h.b16 %v2028
  %v2225 = vunpack.c.l.b16 %v2029
  %v2226 = vunpack.c.h.b16 %v2029
  %v2227 = vunpack.c.l.b16 %v2030
  %v2228 = vunpack.c.h.b16 %v2030
  %v2229 = vunpack.c.l.b16 %v2031
  %v2230 = vunpack.c.h.b16 %v2031
  %v2231 = vunpack.c.l.b16 %v2032
  %v2232 = vunpack.c.h.b16 %v2032
  %v2233 = vunpack.c.l.b16 %v2033
  %v2234 = vunpack.c.h.b16 %v2033
  %v2235 = vunpack.c.l.b16 %v2034
  %v2236 = vunpack.c.h.b16 %v2034
  %v2237 = vunpack.c.l.b16 %v2035
  %v2238 = vunpack.c.h.b16 %v2035
  %v2239 = vunpack.c.l.b16 %v2036
  %v2240 = vunpack.c.h.b16 %v2036
  %v2241 = vpack.c.b16 %v2115, %v2113
  %v2242 = vpack.c.b16 %v2116, %v2114
  %v2243 = vpack.c.b16 %v2119, %v2117
  %v2244 = vpack.c.b16 %v2120, %v2118
  %v2245 = vpack.c.b16 %v2123, %v2121
  %v2246 = vpack.c.b16 %v2124, %v2122
  %v2247 = vpack.c.b16 %v2127, %v2125
  %v2248 = vpack.c.b16 %v2128, %v2126
  %v2249 = vpack.c.b16 %v2131, %v2129
  %v2250 = vpack.c.b16 %v2132, %v2130
  %v2251 = vpack.c.b16 %v2135, %v2133
  %v2252 = vpack.c.b16 %v2136, %v2134
  %v2253 = vpack.c.b16 %v2139, %v2137
  %v2254 = vpack.c.b16 %v2140, %v2138
  %v2255 = vpack.c.b16 %v2143, %v2141
  %v2256 = vpack.c.b16 %v2144, %v2142
  %v2257 = vpack.c.b16 %v2147, %v2145
  %v2258 = vpack.c.b16 %v2148, %v2146
  %v2259 = vpack.c.b16 %v2151, %v2149
  %v2260 = vpack.c.b16 %v2152, %v2150
  %v2261 = vpack.c.b16 %v2155, %v2153
  %v2262 = vpack.c.b16 %v2156, %v2154
  %v2263 = vpack.c.b16 %v2159, %v2157
  %v2264 = vpack.c.b16 %v2160, %v2158
  %v2265 = vpack.c.b16 %v2163, %v2161
  %v2266 = vpack.c.b16 %v2164, %v2162
  %v2267 = vpack.c.b16 %v2167, %v2165
  %v2268 = vpack.c.b16 %v2168, %v2166
  %v2269 = vpack.c.b16 %v2171, %v2169
  %v2270 = vpack.c.b16 %v2172, %v2170
  %v2271 = vpack.c.b16 %v2175, %v2173
  %v2272 = vpack.c.b16 %v2176, %v2174
  %v2273 = vpack.c.b16 %v2179, %v2177
  %v2274 = vpack.c.b16 %v2180, %v2178
  %v2275 = vpack.c.b16 %v2183, %v2181
  %v2276 = vpack.c.b16 %v2184, %v2182
  %v2277 = vpack.c.b16 %v2187, %v2185
  %v2278 = vpack.c.b16 %v2188, %v2186
  %v2279 = vpack.c.b16 %v2191, %v2189
  %v2280 = vpack.c.b16 %v2192, %v2190
  %v2281 = vpack.c.b16 %v2195, %v2193
  %v2282 = vpack.c.b16 %v2196, %v2194
  %v2283 = vpack.c.b16 %v2199, %v2197
  %v2284 = vpack.c.b16 %v2200, %v2198
  %v2285 = vpack.c.b16 %v2203, %v2201
  %v2286 = vpack.c.b16 %v2204, %v2202
  %v2287 = vpack.c.b16 %v2207, %v2205
  %v2288 = vpack.c.b16 %v2208, %v2206
  %v2289 = vpack.c.b16 %v2211, %v2209
  %v2290 = vpack.c.b16 %v2212, %v2210
  %v2291 = vpack.c.b16 %v2215, %v2213
  %v2292 = vpack.c.b16 %v2216, %v2214
  %v2293 = vpack.c.b16 %v2219, %v2217
  %v2294 = vpack.c.b16 %v2220, %v2218
  %v2295 = vpack.c.b16 %v2223, %v2221
  %v2296 = vpack.c.b16 %v2224, %v2222
  %v2297 = vpack.c.b16 %v2227, %v2225
  %v2298 = vpack.c.b16 %v2228, %v2226
  %v2299 = vpack.c.b16 %v2231, %v2229
  %v2300 = vpack.c.b16 %v2232, %v2230
  %v2301 = vpack.c.b16 %v2235, %v2233
  %v2302 = vpack.c.b16 %v2236, %v2234
  %v2303 = vpack.c.b16 %v2239, %v2237
  %v2304 = vpack.c.b16 %v2240, %v2238
  %2369 = vmatprep.subr.bf16.mxu0 %v2242
  %2370 = vmatpush1.bf16.msra.mxu0 %v2241
  %2371 = vmatprep.subr.bf16.mxu0 %v2244
  %2372 = vmatpush1.bf16.msra.mxu0 %v2243
  %2373 = vmatprep.subr.bf16.mxu0 %v2246
  %2374 = vmatpush1.bf16.msra.mxu0 %v2245
  %2375 = vmatprep.subr.bf16.mxu0 %v2248
  %2376 = vmatpush1.bf16.msra.mxu0 %v2247
  %2377 = vmatprep.subr.bf16.mxu0 %v2250
  %2378 = vmatpush1.bf16.msra.mxu0 %v2249
  %2379 = vmatprep.subr.bf16.mxu0 %v2252
  %2380 = vmatpush1.bf16.msra.mxu0 %v2251
  %2381 = vmatprep.subr.bf16.mxu0 %v2254
  %2382 = vmatpush1.bf16.msra.mxu0 %v2253
  %2383 = vmatprep.subr.bf16.mxu0 %v2256
  %2384 = vmatpush1.bf16.msra.mxu0 %v2255
  %2385 = vmatprep.subr.bf16.mxu0 %v2258
  %2386 = vmatpush1.bf16.msra.mxu0 %v2257
  %2387 = vmatprep.subr.bf16.mxu0 %v2260
  %2388 = vmatpush1.bf16.msra.mxu0 %v2259
  %2389 = vmatprep.subr.bf16.mxu0 %v2262
  %2390 = vmatpush1.bf16.msra.mxu0 %v2261
  %2391 = vmatprep.subr.bf16.mxu0 %v2264
  %2392 = vmatpush1.bf16.msra.mxu0 %v2263
  %2393 = vmatprep.subr.bf16.mxu0 %v2266
  %2394 = vmatpush1.bf16.msra.mxu0 %v2265
  %2395 = vmatprep.subr.bf16.mxu0 %v2268
  %2396 = vmatpush1.bf16.msra.mxu0 %v2267
  %2397 = vmatprep.subr.bf16.mxu0 %v2270
  %2398 = vmatpush1.bf16.msra.mxu0 %v2269
  %2399 = vmatprep.subr.bf16.mxu0 %v2272
  %2400 = vmatpush1.bf16.msra.mxu0 %v2271
  %2401 = vmatprep.mubr.bf16.mxu0 %v1970
  %2402 = vmatmul.mubr.bf16.gmra.mrb[0].mxu0 %v1969
  %v2403 = vpop.f32.mrb[0].mxu0
  %v2404 = vadd.f32 %v2042, %v2403
  %v2405 = vpop.f32.mrb[0].mxu0
  %v2406 = vadd.f32 %v2046, %v2405
  %v2407 = vpop.f32.mrb[0].mxu0
  %v2408 = vpop.f32.mrb[0].mxu0
  %2409 = vdwg.mxu0
  %2410 = vmatprep.subr.bf16.mxu0 %v2274
  %2411 = vmatpush1.bf16.msra.mxu0 %v2273
  %2412 = vmatprep.subr.bf16.mxu0 %v2276
  %2413 = vmatpush1.bf16.msra.mxu0 %v2275
  %2414 = vmatprep.subr.bf16.mxu0 %v2278
  %2415 = vmatpush1.bf16.msra.mxu0 %v2277
  %2416 = vmatprep.subr.bf16.mxu0 %v2280
  %2417 = vmatpush1.bf16.msra.mxu0 %v2279
  %2418 = vmatprep.subr.bf16.mxu0 %v2282
  %2419 = vmatpush1.bf16.msra.mxu0 %v2281
  %2420 = vmatprep.subr.bf16.mxu0 %v2284
  %2421 = vmatpush1.bf16.msra.mxu0 %v2283
  %2422 = vmatprep.subr.bf16.mxu0 %v2286
  %2423 = vmatpush1.bf16.msra.mxu0 %v2285
  %2424 = vmatprep.subr.bf16.mxu0 %v2288
  %2425 = vmatpush1.bf16.msra.mxu0 %v2287
  %2426 = vmatprep.subr.bf16.mxu0 %v2290
  %2427 = vmatpush1.bf16.msra.mxu0 %v2289
  %2428 = vmatprep.subr.bf16.mxu0 %v2292
  %2429 = vmatpush1.bf16.msra.mxu0 %v2291
  %2430 = vmatprep.subr.bf16.mxu0 %v2294
  %2431 = vmatpush1.bf16.msra.mxu0 %v2293
  %2432 = vmatprep.subr.bf16.mxu0 %v2296
  %2433 = vmatpush1.bf16.msra.mxu0 %v2295
  %2434 = vmatprep.subr.bf16.mxu0 %v2298
  %2435 = vmatpush1.bf16.msra.mxu0 %v2297
  %2436 = vmatprep.subr.bf16.mxu0 %v2300
  %2437 = vmatpush1.bf16.msra.mxu0 %v2299
  %2438 = vmatprep.subr.bf16.mxu0 %v2302
  %2439 = vmatpush1.bf16.msra.mxu0 %v2301
  %2440 = vmatprep.subr.bf16.mxu0 %v2304
  %2441 = vmatpush1.bf16.msra.mxu0 %v2303
  %2442 = vmatprep.mubr.bf16.mxu0 %v1972
  %2443 = vmatmul.mubr.bf16.gmra.mrb[0].mxu0 %v1971
  %v2444 = vpop.f32.mrb[0].mxu0
  %v2445 = vadd.f32 %v2404, %v2444
  %v2446 = vpop.f32.mrb[0].mxu0
  %v2447 = vadd.f32 %v2406, %v2446
  %v2448 = vpop.f32.mrb[0].mxu0
  %v2449 = vpop.f32.mrb[0].mxu0
  %2450 = vdwg.mxu0
  %vm2451 = vcmp.ge.f32.partialorder %v2445, 0.0
  %vm2452 = vcmp.ge.f32.partialorder %v2447, 0.0
  %v2453 = vmul.f32 %v2445, 0.2
  %v2454 = vmul.f32 %v2447, 0.2
  %v2455 = vsel %vm2451, %v2445, %v2453
  %v2456 = vsel %vm2452, %v2447, %v2454
  %v2457 = vpack.c.bf16 %v2455, %v2455
  %v2458 = vpack.c.bf16 %v2456, %v2456
  %v2459 = vld [vmem:[%s5] sm:$0xf]
  %v2460 = vld [vmem:[%s5 + $0x4] sm:$0xf]
  %v2461 = vld [vmem:[%s5 + $0x8] sm:$0xf]
  %v2462 = vld [vmem:[%s5 + $0xc] sm:$0xf]
  %v2463 = vld [vmem:[%s5 + $0x10] sm:$0xf]
  %v2464 = vld [vmem:[%s5 + $0x14] sm:$0xf]
  %v2465 = vld [vmem:[%s5 + $0x18] sm:$0xf]
  %v2466 = vld [vmem:[%s5 + $0x1c] sm:$0xf]
  %v2467 = vld [vmem:[%s5 + $0x20] sm:$0xf]
  %v2468 = vld [vmem:[%s5 + $0x24] sm:$0xf]
  %v2469 = vld [vmem:[%s5 + $0x28] sm:$0xf]
  %v2470 = vld [vmem:[%s5 + $0x2c] sm:$0xf]
  %v2471 = vld [vmem:[%s5 + $0x30] sm:$0xf]
  %v2472 = vld [vmem:[%s5 + $0x34] sm:$0xf]
  %v2473 = vld [vmem:[%s5 + $0x38] sm:$0xf]
  %v2474 = vld [vmem:[%s5 + $0x3c] sm:$0xf]
  %v2475 = vld [vmem:[%s5 + $0x40] sm:$0xf]
  %v2476 = vld [vmem:[%s5 + $0x44] sm:$0xf]
  %v2477 = vld [vmem:[%s5 + $0x48] sm:$0xf]
  %v2478 = vld [vmem:[%s5 + $0x4c] sm:$0xf]
  %v2479 = vld [vmem:[%s5 + $0x50] sm:$0xf]
  %v2480 = vld [vmem:[%s5 + $0x54] sm:$0xf]
  %v2481 = vld [vmem:[%s5 + $0x58] sm:$0xf]
  %v2482 = vld [vmem:[%s5 + $0x5c] sm:$0xf]
  %v2483 = vld [vmem:[%s5 + $0x60] sm:$0xf]
  %v2484 = vld [vmem:[%s5 + $0x64] sm:$0xf]
  %v2485 = vld [vmem:[%s5 + $0x68] sm:$0xf]
  %v2486 = vld [vmem:[%s5 + $0x6c] sm:$0xf]
  %v2487 = vld [vmem:[%s5 + $0x70] sm:$0xf]
  %v2488 = vld [vmem:[%s5 + $0x74] sm:$0xf]
  %v2489 = vld [vmem:[%s5 + $0x78] sm:$0xf]
  %v2490 = vld [vmem:[%s5 + $0x7c] sm:$0xf]
  %v2491 = vld [vmem:[%s6] sm:$0x1]
  %v2493 = vlaneseq
  %v2494 = vshrl.u32 %v2493, 7
  %v2495 = vsub.s32 0, %v2494
  %v2496 = vrot.slane %v2491, %v2495
  %v2530 = vunpack.c.l.b16 %v2459
  %v2531 = vunpack.c.l.b16 %v2460
  %v2532 = vunpack.c.l.b16 %v2461
  %v2533 = vunpack.c.l.b16 %v2462
  %v2534 = vunpack.c.l.b16 %v2463
  %v2535 = vunpack.c.l.b16 %v2464
  %v2536 = vunpack.c.l.b16 %v2465
  %v2537 = vunpack.c.l.b16 %v2466
  %v2538 = vunpack.c.l.b16 %v2467
  %v2539 = vunpack.c.l.b16 %v2468
  %v2540 = vunpack.c.l.b16 %v2469
  %v2541 = vunpack.c.l.b16 %v2470
  %v2542 = vunpack.c.l.b16 %v2471
  %v2543 = vunpack.c.l.b16 %v2472
  %v2544 = vunpack.c.l.b16 %v2473
  %v2545 = vunpack.c.l.b16 %v2474
  %v2546 = vunpack.c.l.b16 %v2475
  %v2547 = vunpack.c.l.b16 %v2476
  %v2548 = vunpack.c.l.b16 %v2477
  %v2549 = vunpack.c.l.b16 %v2478
  %v2550 = vunpack.c.l.b16 %v2479
  %v2551 = vunpack.c.l.b16 %v2480
  %v2552 = vunpack.c.l.b16 %v2481
  %v2553 = vunpack.c.l.b16 %v2482
  %v2554 = vunpack.c.l.b16 %v2483
  %v2555 = vunpack.c.l.b16 %v2484
  %v2556 = vunpack.c.l.b16 %v2485
  %v2557 = vunpack.c.l.b16 %v2486
  %v2558 = vunpack.c.l.b16 %v2487
  %v2559 = vunpack.c.l.b16 %v2488
  %v2560 = vunpack.c.l.b16 %v2489
  %v2561 = vunpack.c.l.b16 %v2490
  %v2562 = vpack.c.b16 %v2531, %v2530
  %v2563 = vpack.c.b16 %v2533, %v2532
  %v2564 = vpack.c.b16 %v2535, %v2534
  %v2565 = vpack.c.b16 %v2537, %v2536
  %v2566 = vpack.c.b16 %v2539, %v2538
  %v2567 = vpack.c.b16 %v2541, %v2540
  %v2568 = vpack.c.b16 %v2543, %v2542
  %v2569 = vpack.c.b16 %v2545, %v2544
  %v2570 = vpack.c.b16 %v2547, %v2546
  %v2571 = vpack.c.b16 %v2549, %v2548
  %v2572 = vpack.c.b16 %v2551, %v2550
  %v2573 = vpack.c.b16 %v2553, %v2552
  %v2574 = vpack.c.b16 %v2555, %v2554
  %v2575 = vpack.c.b16 %v2557, %v2556
  %v2576 = vpack.c.b16 %v2559, %v2558
  %v2577 = vpack.c.b16 %v2561, %v2560
  %2594 = vmatprep.subr.bf16.mxu0 0
  %2595 = vmatpush1.bf16.msra.mxu0 %v2562
  %2596 = vmatprep.subr.bf16.mxu0 0
  %2597 = vmatpush1.bf16.msra.mxu0 %v2563
  %2598 = vmatprep.subr.bf16.mxu0 0
  %2599 = vmatpush1.bf16.msra.mxu0 %v2564
  %2600 = vmatprep.subr.bf16.mxu0 0
  %2601 = vmatpush1.bf16.msra.mxu0 %v2565
  %2602 = vmatprep.subr.bf16.mxu0 0
  %2603 = vmatpush1.bf16.msra.mxu0 %v2566
  %2604 = vmatprep.subr.bf16.mxu0 0
  %2605 = vmatpush1.bf16.msra.mxu0 %v2567
  %2606 = vmatprep.subr.bf16.mxu0 0
  %2607 = vmatpush1.bf16.msra.mxu0 %v2568
  %2608 = vmatprep.subr.bf16.mxu0 0
  %2609 = vmatpush1.bf16.msra.mxu0 %v2569
  %2610 = vmatprep.subr.bf16.mxu0 0
  %2611 = vmatpush1.bf16.msra.mxu0 %v2570
  %2612 = vmatprep.subr.bf16.mxu0 0
  %2613 = vmatpush1.bf16.msra.mxu0 %v2571
  %2614 = vmatprep.subr.bf16.mxu0 0
  %2615 = vmatpush1.bf16.msra.mxu0 %v2572
  %2616 = vmatprep.subr.bf16.mxu0 0
  %2617 = vmatpush1.bf16.msra.mxu0 %v2573
  %2618 = vmatprep.subr.bf16.mxu0 0
  %2619 = vmatpush1.bf16.msra.mxu0 %v2574
  %2620 = vmatprep.subr.bf16.mxu0 0
  %2621 = vmatpush1.bf16.msra.mxu0 %v2575
  %2622 = vmatprep.subr.bf16.mxu0 0
  %2623 = vmatpush1.bf16.msra.mxu0 %v2576
  %2624 = vmatprep.subr.bf16.mxu0 0
  %2625 = vmatpush1.bf16.msra.mxu0 %v2577
  %2626 = vmatprep.mubr.bf16.mxu0 %v2458
  %2627 = vmatmul.mubr.bf16.gmra.mrb[0].mxu0 %v2457
  %v2628 = vpop.f32.mrb[0].mxu0
  %v2629 = vadd.f32 %v2496, %v2628
  %v2630 = vpop.f32.mrb[0].mxu0
  %v2631 = vpop.f32.mrb[0].mxu0
  %v2632 = vpop.f32.mrb[0].mxu0
  %2633 = vdwg.mxu0
  %vm2634 = vcmp.ge.f32.partialorder %v2629, 0.0
  %v2635 = vmul.f32 %v2629, 0.2
  %v2636 = vsel %vm2634, %v2629, %v2635
  %v2637 = vpack.c.bf16 %v2636, %v2636
  %v2638 = vld [vmem:[%s7] sm:$0xf]
  %v2639 = vld [vmem:[%s7 + $0x4] sm:$0xf]
  %v2640 = vld [vmem:[%s7 + $0x8] sm:$0xf]
  %v2641 = vld [vmem:[%s7 + $0xc] sm:$0xf]
  %v2642 = vld [vmem:[%s7 + $0x10] sm:$0xf]
  %v2643 = vld [vmem:[%s7 + $0x14] sm:$0xf]
  %v2644 = vld [vmem:[%s7 + $0x18] sm:$0xf]
  %v2645 = vld [vmem:[%s7 + $0x1c] sm:$0xf]
  %v2646 = vld [vmem:[%s7 + $0x20] sm:$0xf]
  %v2647 = vld [vmem:[%s7 + $0x24] sm:$0xf]
  %v2648 = vld [vmem:[%s7 + $0x28] sm:$0xf]
  %v2649 = vld [vmem:[%s7 + $0x2c] sm:$0xf]
  %v2650 = vld [vmem:[%s7 + $0x30] sm:$0xf]
  %v2651 = vld [vmem:[%s7 + $0x34] sm:$0xf]
  %v2652 = vld [vmem:[%s7 + $0x38] sm:$0xf]
  %v2653 = vld [vmem:[%s7 + $0x3c] sm:$0xf]
  %v2654 = vld [vmem:[%s8] sm:$0x1]
  %v2656 = vlaneseq
  %v2657 = vshrl.u32 %v2656, 7
  %v2658 = vsub.s32 0, %v2657
  %v2659 = vrot.slane %v2654, %v2658
  %v2677 = vunpack.c.l.b16 %v2638
  %v2678 = vunpack.c.l.b16 %v2639
  %v2679 = vunpack.c.l.b16 %v2640
  %v2680 = vunpack.c.l.b16 %v2641
  %v2681 = vunpack.c.l.b16 %v2642
  %v2682 = vunpack.c.l.b16 %v2643
  %v2683 = vunpack.c.l.b16 %v2644
  %v2684 = vunpack.c.l.b16 %v2645
  %v2685 = vunpack.c.l.b16 %v2646
  %v2686 = vunpack.c.l.b16 %v2647
  %v2687 = vunpack.c.l.b16 %v2648
  %v2688 = vunpack.c.l.b16 %v2649
  %v2689 = vunpack.c.l.b16 %v2650
  %v2690 = vunpack.c.l.b16 %v2651
  %v2691 = vunpack.c.l.b16 %v2652
  %v2692 = vunpack.c.l.b16 %v2653
  %v2693 = vpack.c.b16 %v2678, %v2677
  %v2694 = vpack.c.b16 %v2680, %v2679
  %v2695 = vpack.c.b16 %v2682, %v2681
  %v2696 = vpack.c.b16 %v2684, %v2683
  %v2697 = vpack.c.b16 %v2686, %v2685
  %v2698 = vpack.c.b16 %v2688, %v2687
  %v2699 = vpack.c.b16 %v2690, %v2689
  %v2700 = vpack.c.b16 %v2692, %v2691
  %2709 = vmatprep.subr.bf16.mxu0 0
  %2710 = vmatpush1.bf16.msra.mxu0 %v2693
  %2711 = vmatprep.subr.bf16.mxu0 0
  %2712 = vmatpush1.bf16.msra.mxu0 %v2694
  %2713 = vmatprep.subr.bf16.mxu0 0
  %2714 = vmatpush1.bf16.msra.mxu0 %v2695
  %2715 = vmatprep.subr.bf16.mxu0 0
  %2716 = vmatpush1.bf16.msra.mxu0 %v2696
  %2717 = vmatprep.subr.bf16.mxu0 0
  %2718 = vmatpush1.bf16.msra.mxu0 %v2697
  %2719 = vmatprep.subr.bf16.mxu0 0
  %2720 = vmatpush1.bf16.msra.mxu0 %v2698
  %2721 = vmatprep.subr.bf16.mxu0 0
  %2722 = vmatpush1.bf16.msra.mxu0 %v2699
  %2723 = vmatprep.subr.bf16.mxu0 0
  %2724 = vmatpush1.bf16.msra.mxu0 %v2700
  %2725 = vmatprep.subr.bf16.mxu0 0
  %2726 = vmatpush1.bf16.msra.mxu0 0
  %2727 = vmatprep.subr.bf16.mxu0 0
  %2728 = vmatpush1.bf16.msra.mxu0 0
  %2729 = vmatprep.subr.bf16.mxu0 0
  %2730 = vmatpush1.bf16.msra.mxu0 0
  %2731 = vmatprep.subr.bf16.mxu0 0
  %2732 = vmatpush1.bf16.msra.mxu0 0
  %2733 = vmatprep.subr.bf16.mxu0 0
  %2734 = vmatpush1.bf16.msra.mxu0 0
  %2735 = vmatprep.subr.bf16.mxu0 0
  %2736 = vmatpush1.bf16.msra.mxu0 0
  %2737 = vmatprep.subr.bf16.mxu0 0
  %2738 = vmatpush1.bf16.msra.mxu0 0
  %2739 = vmatprep.subr.bf16.mxu0 0
  %2740 = vmatpush1.bf16.msra.mxu0 0
  %2741 = vmatprep.mubr.bf16.mxu0 0
  %2742 = vmatmul.mubr.bf16.gmra.mrb[0].mxu0 %v2637
  %v2743 = vpop.f32.mrb[0].mxu0
  %v2744 = vadd.f32 %v2659, %v2743
  %v2745 = vpop.f32.mrb[0].mxu0
  %v2746 = vpop.f32.mrb[0].mxu0
  %v2747 = vpop.f32.mrb[0].mxu0
  %2748 = vdwg.mxu0
  %vm2749 = vcmp.ge.f32.partialorder %v2744, 0.0
  %v2750 = vmul.f32 %v2744, 0.2
  %v2751 = vsel %vm2749, %v2744, %v2750
  %v2752 = vpack.c.bf16 %v2751, %v2751
  %v2753 = vld [vmem:[%s9] sm:$0xf]
  %v2754 = vld [vmem:[%s9 + $0x4] sm:$0xf]
  %v2755 = vld [vmem:[%s9 + $0x8] sm:$0xf]
  %v2756 = vld [vmem:[%s9 + $0xc] sm:$0xf]
  %v2757 = vld [vmem:[%s9 + $0x10] sm:$0xf]
  %v2758 = vld [vmem:[%s9 + $0x14] sm:$0xf]
  %v2759 = vld [vmem:[%s9 + $0x18] sm:$0xf]
  %v2760 = vld [vmem:[%s9 + $0x1c] sm:$0xf]
  %v2761 = vld [vmem:[%s9 + $0x20] sm:$0xf]
  %v2762 = vld [vmem:[%s9 + $0x24] sm:$0xf]
  %v2763 = vld [vmem:[%s9 + $0x28] sm:$0xf]
  %v2764 = vld [vmem:[%s9 + $0x2c] sm:$0xf]
  %v2765 = vld [vmem:[%s9 + $0x30] sm:$0xf]
  %v2766 = vld [vmem:[%s9 + $0x34] sm:$0xf]
  %v2767 = vld [vmem:[%s9 + $0x38] sm:$0xf]
  %v2768 = vld [vmem:[%s9 + $0x3c] sm:$0xf]
  %v2769 = vld [vmem:[%s10] sm:$0x1]
  %v2771 = vlaneseq
  %v2772 = vshrl.u32 %v2771, 7
  %v2773 = vsub.s32 0, %v2772
  %v2774 = vrot.slane %v2769, %v2773
  %v2792 = vunpack.c.l.b16 %v2753
  %v2793 = vunpack.c.l.b16 %v2754
  %v2794 = vunpack.c.l.b16 %v2755
  %v2795 = vunpack.c.l.b16 %v2756
  %v2796 = vunpack.c.l.b16 %v2757
  %v2797 = vunpack.c.l.b16 %v2758
  %v2798 = vunpack.c.l.b16 %v2759
  %v2799 = vunpack.c.l.b16 %v2760
  %v2800 = vunpack.c.l.b16 %v2761
  %v2801 = vunpack.c.l.b16 %v2762
  %v2802 = vunpack.c.l.b16 %v2763
  %v2803 = vunpack.c.l.b16 %v2764
  %v2804 = vunpack.c.l.b16 %v2765
  %v2805 = vunpack.c.l.b16 %v2766
  %v2806 = vunpack.c.l.b16 %v2767
  %v2807 = vunpack.c.l.b16 %v2768
  %v2808 = vpack.c.b16 %v2793, %v2792
  %v2809 = vpack.c.b16 %v2795, %v2794
  %v2810 = vpack.c.b16 %v2797, %v2796
  %v2811 = vpack.c.b16 %v2799, %v2798
  %v2812 = vpack.c.b16 %v2801, %v2800
  %v2813 = vpack.c.b16 %v2803, %v2802
  %v2814 = vpack.c.b16 %v2805, %v2804
  %v2815 = vpack.c.b16 %v2807, %v2806
  %2824 = vmatprep.subr.bf16.mxu0 0
  %2825 = vmatpush1.bf16.msra.mxu0 %v2808
  %2826 = vmatprep.subr.bf16.mxu0 0
  %2827 = vmatpush1.bf16.msra.mxu0 %v2809
  %2828 = vmatprep.subr.bf16.mxu0 0
  %2829 = vmatpush1.bf16.msra.mxu0 %v2810
  %2830 = vmatprep.subr.bf16.mxu0 0
  %2831 = vmatpush1.bf16.msra.mxu0 %v2811
  %2832 = vmatprep.subr.bf16.mxu0 0
  %2833 = vmatpush1.bf16.msra.mxu0 %v2812
  %2834 = vmatprep.subr.bf16.mxu0 0
  %2835 = vmatpush1.bf16.msra.mxu0 %v2813
  %2836 = vmatprep.subr.bf16.mxu0 0
  %2837 = vmatpush1.bf16.msra.mxu0 %v2814
  %2838 = vmatprep.subr.bf16.mxu0 0
  %2839 = vmatpush1.bf16.msra.mxu0 %v2815
  %2840 = vmatprep.subr.bf16.mxu0 0
  %2841 = vmatpush1.bf16.msra.mxu0 0
  %2842 = vmatprep.subr.bf16.mxu0 0
  %2843 = vmatpush1.bf16.msra.mxu0 0
  %2844 = vmatprep.subr.bf16.mxu0 0
  %2845 = vmatpush1.bf16.msra.mxu0 0
  %2846 = vmatprep.subr.bf16.mxu0 0
  %2847 = vmatpush1.bf16.msra.mxu0 0
  %2848 = vmatprep.subr.bf16.mxu0 0
  %2849 = vmatpush1.bf16.msra.mxu0 0
  %2850 = vmatprep.subr.bf16.mxu0 0
  %2851 = vmatpush1.bf16.msra.mxu0 0
  %2852 = vmatprep.subr.bf16.mxu0 0
  %2853 = vmatpush1.bf16.msra.mxu0 0
  %2854 = vmatprep.subr.bf16.mxu0 0
  %2855 = vmatpush1.bf16.msra.mxu0 0
  %2856 = vmatprep.mubr.bf16.mxu0 0
  %2857 = vmatmul.mubr.bf16.gmra.mrb[0].mxu0 %v2752
  %v2858 = vpop.f32.mrb[0].mxu0
  %v2859 = vadd.f32 %v2774, %v2858
  %v2860 = vpop.f32.mrb[0].mxu0
  %v2861 = vpop.f32.mrb[0].mxu0
  %v2862 = vpop.f32.mrb[0].mxu0
  %2863 = vdwg.mxu0
  %vm2864 = vcmp.ge.f32.partialorder %v2859, 0.0
  %v2865 = vmul.f32 %v2859, 0.2
  %v2866 = vsel %vm2864, %v2859, %v2865
  %2867 = vst [vmem:[%s11] sm:$0xff] %v2866
  // Predicated region
  $region46: #{_lambda_.1} parent=0 // pred_check
    _
  $region47: #{_lambda_.1} parent=0 // pred_check_branch
    %2869 = sbr.rel (0) target = $region49
  $region48: #{_lambda_.1} parent=0 // pred_region
    _
  $region49: #{_lambda_.1} parent=0 // pred_fallthru
    _
  // Predicated region
  $region50: #{_lambda_.1} parent=0 // pred_check
    _
  $region51: #{_lambda_.1} parent=0 // pred_check_branch
    %2871 = sbr.rel (0) target = $region53
  $region52: #{_lambda_.1} parent=0 // pred_region
    _
  $region53: #{_lambda_.1} parent=0 // pred_fallthru
    _

</llo_original>
